<compile_context>
chip_gen: v7x
topology: tpu7x:2x2x1
jax: 0.10.0
libtpu: 0.0.40
codegen_flags: <defaults>
</compile_context>

<pallas_src>
import functools
import math

import jax
import jax.numpy as jnp
from jax.experimental import pallas as pl
from jax.experimental.pallas import tpu as pltpu


# ----------------------------- kernel body ---------------------------------


def _encoder_layer_kernel(
    x_ref,
    ln1_g_ref, ln1_b_ref,
    wq_ref, bq_ref, wk_ref, bk_ref, wv_ref, bv_ref, wo_ref, bo_ref,
    ln2_g_ref, ln2_b_ref,
    w1_ref, b1_ref, w2_ref, b2_ref,
    o_ref,
    q_sc, k_sc, v_sc, attn_sc,
    *, heads: int, tq: int, eps: float = 1e-5,
):
    f32 = jnp.float32
    bf16 = jnp.bfloat16

    S = x_ref.shape[1]
    D = x_ref.shape[2]
    dh = D // heads
    scale = 1.0 / math.sqrt(dh)

    def layer_norm(z, g, b):
        mu = jnp.mean(z, axis=-1, keepdims=True)
        var = jnp.mean((z - mu) ** 2, axis=-1, keepdims=True)
        return (z - mu) * jax.lax.rsqrt(var + eps) * g + b

    qb = pl.program_id(1)

    # ---- once per batch: LN1 + Q/K/V projections -> persistent bf16 scratch ----
    @pl.when(qb == 0)
    def _():
        y = layer_norm(x_ref[0], ln1_g_ref[0], ln1_b_ref[0]).astype(bf16)
        q = jnp.dot(y, wq_ref[...], preferred_element_type=f32) + bq_ref[0]
        q_sc[...] = (q * scale).astype(bf16)      # fold 1/sqrt(dh) into q once
        k = jnp.dot(y, wk_ref[...], preferred_element_type=f32) + bk_ref[0]
        k_sc[...] = k.astype(bf16)
        v = jnp.dot(y, wv_ref[...], preferred_element_type=f32) + bv_ref[0]
        v_sc[...] = v.astype(bf16)

    # ---- per q-block: attention + residual + LN2 + FFN + residual ----
    r0 = pl.multiple_of(qb * tq, tq)
    x_blk = x_ref[0, pl.ds(r0, tq), :]            # (tq, D) f32, read from ref
    q_blk = q_sc[pl.ds(r0, tq), :]                # (tq, D) bf16 (already scaled)
    k_all = k_sc[...]                             # (S, D) bf16
    v_all = v_sc[...]                             # (S, D) bf16

    for h in range(heads):                        # static lane offsets per head
        c0 = h * dh
        qh = q_blk[:, c0:c0 + dh]                 # (tq, dh) bf16
        kh = k_all[:, c0:c0 + dh]                 # (S, dh)  bf16
        vh = v_all[:, c0:c0 + dh]                 # (S, dh)  bf16
        # qh @ kh.T without materializing the transpose.
        s = jax.lax.dot_general(qh, kh, (((1,), (1,)), ((), ())),
                                preferred_element_type=f32)        # (tq, S) f32
        s = s - jnp.max(s, axis=-1, keepdims=True)
        p = jnp.exp(s)
        p = p * pl.reciprocal(jnp.sum(p, axis=-1, keepdims=True), approx=True)
        # Store bounds this head's live range; column concat via scratch.
        attn_sc[:, c0:c0 + dh] = jnp.dot(
            p.astype(bf16), vh, preferred_element_type=f32).astype(bf16)

    # Single full-K output projection over the concatenated heads.
    attn = jnp.dot(attn_sc[...], wo_ref[...],
                   preferred_element_type=f32) + bo_ref[0]          # (tq, D) f32

    x1 = x_blk + attn                             # residual 1

    # ---- LayerNorm 2 + FFN (Linear -> ReLU -> Linear) ----
    y2 = layer_norm(x1, ln2_g_ref[0], ln2_b_ref[0]).astype(bf16)
    h1 = jnp.dot(y2, w1_ref[...], preferred_element_type=f32) + b1_ref[0]
    h1 = jnp.maximum(h1, 0.0)
    ff = jnp.dot(h1.astype(bf16), w2_ref[...],
                 preferred_element_type=f32) + b2_ref[0]

    o_ref[0] = (x1 + ff).astype(o_ref.dtype)      # residual 2 -> (1, tq, D) block


# ----------------------------- wrapper --------------------------------------


def _tpu_generation_info():
    """Returns (physical_vmem_bytes, tq_cap). Perf heuristic only — a failed
    query falls back to conservative defaults and never masks kernel errors."""
    kind = ""
    try:
        kind = jax.devices()[0].device_kind.lower()
    except Exception:  # info query only
        pass
    tq_cap = 128 if "v5" in kind else 256   # v5e MXU is 4x128x128; v6e/v7x 2x256x256
    vmem = None
    try:
        vmem = int(pltpu.get_tpu_info().vmem_capacity_bytes)
    except Exception:  # info query only
        pass
    if vmem is None or vmem <= 0:
        vmem = (64 << 20) if "7" in kind else (128 << 20)
    return vmem, tq_cap


def _pick_tq(S: int, cap: int) -> int:
    """Largest tq <= cap that divides S and is a multiple of 8 (sublane aligned)."""
    for cand in range(min(cap, S), 7, -1):
        if S % cand == 0 and cand % 8 == 0:
            return cand
    # TODO(synk): pad/mask ragged S instead of whole-sequence fallback.
    return S


def prepare_params_for_kernel(params):
    """Pre-cast matmul weights to bf16 ONCE; callers should cache the result so
    each encoder_layer call does not pay HBM cast traffic for the weights."""
    bf = jnp.bfloat16
    out = dict(params)
    for name in ("wq", "wk", "wv", "wo", "w1", "w2"):
        out[name] = params[name].astype(bf)
    return out


def _build_call(B, S, D, H, heads, tq, vmem_limit):
    n_q = S // tq

    def wspec(shape):
        return pl.BlockSpec(shape, lambda b, qb: (0, 0))

    in_specs = [
        pl.BlockSpec((1, S, D), lambda b, qb: (b, 0, 0)),   # x (fetched once / batch)
        wspec((1, D)), wspec((1, D)),                       # ln1 gamma/beta
        wspec((D, D)), wspec((1, D)),                       # Wq, bq
        wspec((D, D)), wspec((1, D)),                       # Wk, bk
        wspec((D, D)), wspec((1, D)),                       # Wv, bv
        wspec((D, D)), wspec((1, D)),                       # Wo, bo
        wspec((1, D)), wspec((1, D)),                       # ln2 gamma/beta
        wspec((D, H)), wspec((1, H)),                       # W1, b1
        wspec((H, D)), wspec((1, D)),                       # W2, b2
    ]
    out_spec = pl.BlockSpec((1, tq, D), lambda b, qb: (b, qb, 0))

    kernel = functools.partial(_encoder_layer_kernel, heads=heads, tq=tq)
    return pl.pallas_call(
        kernel,
        out_shape=jax.ShapeDtypeStruct((B, S, D), jnp.float32),
        grid_spec=pltpu.PrefetchScalarGridSpec(
            num_scalar_prefetch=0,
            grid=(B, n_q),
            in_specs=in_specs,
            out_specs=out_spec,
            scratch_shapes=[
                pltpu.VMEM((S, D), jnp.bfloat16),    # q (pre-scaled, bf16)
                pltpu.VMEM((S, D), jnp.bfloat16),    # k
                pltpu.VMEM((S, D), jnp.bfloat16),    # v
                pltpu.VMEM((tq, D), jnp.bfloat16),   # per-head attn outputs (concat)
            ]),
        compiler_params=pltpu.CompilerParams(
            dimension_semantics=("parallel", "arbitrary"),
            vmem_limit_bytes=vmem_limit),
    )


def encoder_layer(x, params, *, heads: int):
    """x: (B, S, D) float32. params: dict (see init_params); matmul weights may
    already be bf16 (prepare_params_for_kernel) to avoid a per-call cast."""
    B, S, D = x.shape
    assert D % heads == 0, "`inputs` must be divisible by `heads`"
    H = params["w1"].shape[1]

    if params["wq"].dtype != jnp.bfloat16:
        params = prepare_params_for_kernel(params)

    vmem_phys, tq_cap = _tpu_generation_info()
    tq = _pick_tq(S, tq_cap)

    # VMEM budget from the actual resident set (double-buffered pipeline blocks,
    # bf16 weights, persistent scratch, live score / FFN intermediates) + margin.
    x_buf = 2 * 4 * S * D                            # (1,S,D) f32 input, 2 bufs
    out_buf = 2 * 4 * tq * D                         # (1,tq,D) f32 output, 2 bufs
    w_buf = 2 * 2 * (4 * D * D + 2 * D * H)          # bf16 matmul weights, 2 bufs
    vec_buf = 2 * 4 * (6 * D + 2 * H)                # f32 LN params + biases, 2 bufs
    scr = 2 * (3 * S * D + tq * D)                   # bf16 scratch
    live = 8 * tq * S + 4 * tq * H + 12 * S * D      # scores/probs, FFN mid, init QKV
    need = x_buf + out_buf + w_buf + vec_buf + scr + live
    vmem_limit = int(min(max(int(need * 1.25) + (4 << 20), 32 << 20),
                         int(0.85 * vmem_phys)))

    args = (
        x,
        params["ln1_g"], params["ln1_b"],
        params["wq"], params["bq"],
        params["wk"], params["bk"],
        params["wv"], params["bv"],
        params["wo"], params["bo"],
        params["ln2_g"], params["ln2_b"],
        params["w1"], params["b1"],
        params["w2"], params["b2"],
    )
    return _build_call(B, S, D, H, heads, tq, vmem_limit)(*args)


# ----------------------------- params / reference ---------------------------


def init_params(key, inputs: int, hidden: int):
    D, H = inputs, hidden
    keys = jax.random.split(key, 8)
    s = 0.05
    return {
        "ln1_g": jnp.ones((1, D), jnp.float32),
        "ln1_b": jnp.zeros((1, D), jnp.float32),
        "wq": s * jax.random.normal(keys[0], (D, D), jnp.float32),
        "bq": jnp.zeros((1, D), jnp.float32),
        "wk": s * jax.random.normal(keys[1], (D, D), jnp.float32),
        "bk": jnp.zeros((1, D), jnp.float32),
        "wv": s * jax.random.normal(keys[2], (D, D), jnp.float32),
        "bv": jnp.zeros((1, D), jnp.float32),
        "wo": s * jax.random.normal(keys[3], (D, D), jnp.float32),
        "bo": jnp.zeros((1, D), jnp.float32),
        "ln2_g": jnp.ones((1, D), jnp.float32),
        "ln2_b": jnp.zeros((1, D), jnp.float32),
        "w1": s * jax.random.normal(keys[4], (D, H), jnp.float32),
        "b1": 0.01 * jax.random.normal(keys[5], (1, H), jnp.float32),
        "w2": s * jax.random.normal(keys[6], (H, D), jnp.float32),
        "b2": 0.01 * jax.random.normal(keys[7], (1, D), jnp.float32),
    }


def encoder_layer_ref(x, params, *, heads: int, eps: float = 1e-5):
    """Pure-JAX f32 reference (same math as the PyTorch module, eval mode)."""
    def ln(z, g, b):
        mu = jnp.mean(z, axis=-1, keepdims=True)
        var = jnp.mean((z - mu) ** 2, axis=-1, keepdims=True)
        return (z - mu) / jnp.sqrt(var + eps) * g + b

    B, S, D = x.shape
    dh = D // heads
    y = ln(x, params["ln1_g"][0], params["ln1_b"][0])
    q = y @ params["wq"] + params["bq"][0]
    k = y @ params["wk"] + params["bk"][0]
    v = y @ params["wv"] + params["bv"][0]
    q = q.reshape(B, S, heads, dh).transpose(0, 2, 1, 3)
    k = k.reshape(B, S, heads, dh).transpose(0, 2, 1, 3)
    v = v.reshape(B, S, heads, dh).transpose(0, 2, 1, 3)
    s = jnp.einsum("bhqd,bhkd->bhqk", q, k) / math.sqrt(dh)
    p = jax.nn.softmax(s, axis=-1)
    o = jnp.einsum("bhqk,bhkd->bhqd", p, v).transpose(0, 2, 1, 3).reshape(B, S, D)
    o = o @ params["wo"] + params["bo"][0]
    x1 = x + o
    y2 = ln(x1, params["ln2_g"][0], params["ln2_b"][0])
    ff = jnp.maximum(y2 @ params["w1"] + params["b1"][0], 0.0) @ params["w2"] + params["b2"][0]
    return x1 + ff


if __name__ == "__main__":
    B, S, D, HEADS, HIDDEN = 2, 8, 32, 4, 64
    key = jax.random.PRNGKey(0)
    kx, kp = jax.random.split(key)
    x = jax.random.normal(kx, (B, S, D), jnp.float32)
    params = init_params(kp, D, HIDDEN)
    kparams = prepare_params_for_kernel(params)   # cast weights to bf16 once

    out = encoder_layer(x, kparams, heads=HEADS)
    out = jax.block_until_ready(out)

    ref = encoder_layer_ref(x, params, heads=HEADS)
    assert out.shape == (B, S, D)
    # bf16 matmul operands (f32 accumulation) + approx reciprocal in the softmax
    # denominator -> small numeric delta vs the f32 reference.
    assert jnp.allclose(out, ref, atol=2e-2, rtol=2e-2), "mismatch vs reference"
    print("KERNEL_OK")
</pallas_src>

<mosaic_0001>
module attributes {stable_mosaic.version = 11 : i64} {
  func.func @_encoder_layer_kernel(%arg0: i32, %arg1: i32, %arg2: memref<1x8x32xf32, #tpu.memory_space<vmem>>, %arg3: memref<1x32xf32, #tpu.memory_space<vmem>>, %arg4: memref<1x32xf32, #tpu.memory_space<vmem>>, %arg5: memref<32x32xbf16, #tpu.memory_space<vmem>>, %arg6: memref<1x32xf32, #tpu.memory_space<vmem>>, %arg7: memref<32x32xbf16, #tpu.memory_space<vmem>>, %arg8: memref<1x32xf32, #tpu.memory_space<vmem>>, %arg9: memref<32x32xbf16, #tpu.memory_space<vmem>>, %arg10: memref<1x32xf32, #tpu.memory_space<vmem>>, %arg11: memref<32x32xbf16, #tpu.memory_space<vmem>>, %arg12: memref<1x32xf32, #tpu.memory_space<vmem>>, %arg13: memref<1x32xf32, #tpu.memory_space<vmem>>, %arg14: memref<1x32xf32, #tpu.memory_space<vmem>>, %arg15: memref<32x64xbf16, #tpu.memory_space<vmem>>, %arg16: memref<1x64xf32, #tpu.memory_space<vmem>>, %arg17: memref<64x32xbf16, #tpu.memory_space<vmem>>, %arg18: memref<1x32xf32, #tpu.memory_space<vmem>>, %arg19: memref<1x8x32xf32, #tpu.memory_space<vmem>>, %arg20: memref<8x32xbf16, #tpu.memory_space<vmem>>, %arg21: memref<8x32xbf16, #tpu.memory_space<vmem>>, %arg22: memref<8x32xbf16, #tpu.memory_space<vmem>>, %arg23: memref<8x32xbf16, #tpu.memory_space<vmem>>) attributes {dimension_semantics = [#tpu.dimension_semantics<parallel>, #tpu.dimension_semantics<arbitrary>], iteration_bounds = array<i64: 2, 1>, scalar_prefetch = 0 : i64, scratch_operands = 4 : i64, tpu.core_type = #tpu.core_type<tc>, window_params = [{transform_indices = @transform_0, window_bounds = array<i64: 1, 8, 32>}, {pipeline_mode = #tpu.pipeline_mode<synchronous>, transform_indices = @transform_1, window_bounds = array<i64: 1, 32>}, {pipeline_mode = #tpu.pipeline_mode<synchronous>, transform_indices = @transform_2, window_bounds = array<i64: 1, 32>}, {pipeline_mode = #tpu.pipeline_mode<synchronous>, transform_indices = @transform_3, window_bounds = array<i64: 32, 32>}, {pipeline_mode = #tpu.pipeline_mode<synchronous>, transform_indices = @transform_4, window_bounds = array<i64: 1, 32>}, {pipeline_mode = #tpu.pipeline_mode<synchronous>, transform_indices = @transform_5, window_bounds = array<i64: 32, 32>}, {pipeline_mode = #tpu.pipeline_mode<synchronous>, transform_indices = @transform_6, window_bounds = array<i64: 1, 32>}, {pipeline_mode = #tpu.pipeline_mode<synchronous>, transform_indices = @transform_7, window_bounds = array<i64: 32, 32>}, {pipeline_mode = #tpu.pipeline_mode<synchronous>, transform_indices = @transform_8, window_bounds = array<i64: 1, 32>}, {pipeline_mode = #tpu.pipeline_mode<synchronous>, transform_indices = @transform_9, window_bounds = array<i64: 32, 32>}, {pipeline_mode = #tpu.pipeline_mode<synchronous>, transform_indices = @transform_10, window_bounds = array<i64: 1, 32>}, {pipeline_mode = #tpu.pipeline_mode<synchronous>, transform_indices = @transform_11, window_bounds = array<i64: 1, 32>}, {pipeline_mode = #tpu.pipeline_mode<synchronous>, transform_indices = @transform_12, window_bounds = array<i64: 1, 32>}, {pipeline_mode = #tpu.pipeline_mode<synchronous>, transform_indices = @transform_13, window_bounds = array<i64: 32, 64>}, {pipeline_mode = #tpu.pipeline_mode<synchronous>, transform_indices = @transform_14, window_bounds = array<i64: 1, 64>}, {pipeline_mode = #tpu.pipeline_mode<synchronous>, transform_indices = @transform_15, window_bounds = array<i64: 64, 32>}, {pipeline_mode = #tpu.pipeline_mode<synchronous>, transform_indices = @transform_16, window_bounds = array<i64: 1, 32>}, {transform_indices = @transform_17, window_bounds = array<i64: 1, 8, 32>}]} {
    %c0_i32 = arith.constant 0 : i32
    %0 = arith.cmpi eq, %arg1, %c0_i32 : i32
    %1 = arith.extui %0 : i1 to i32
    %c0_i32_0 = arith.constant 0 : i32
    %2 = arith.cmpi ne, %1, %c0_i32_0 : i32
    scf.if %2 {
      %c0_57 = arith.constant 0 : index
      %c0_58 = arith.constant 0 : index
      %c0_59 = arith.constant 0 : index
      %143 = vector.load %arg2[%c0_57, %c0_58, %c0_59] : memref<1x8x32xf32, #tpu.memory_space<vmem>>, vector<1x8x32xf32>
      %144 = vector.shape_cast %143 : vector<1x8x32xf32> to vector<8x32xf32>
      %c0_60 = arith.constant 0 : index
      %c0_61 = arith.constant 0 : index
      %145 = vector.load %arg3[%c0_60, %c0_61] : memref<1x32xf32, #tpu.memory_space<vmem>>, vector<1x32xf32>
      %146 = vector.shape_cast %145 : vector<1x32xf32> to vector<32xf32>
      %c0_62 = arith.constant 0 : index
      %c0_63 = arith.constant 0 : index
      %147 = vector.load %arg4[%c0_62, %c0_63] : memref<1x32xf32, #tpu.memory_space<vmem>>, vector<1x32xf32>
      %148 = vector.shape_cast %147 : vector<1x32xf32> to vector<32xf32>
      %cst_64 = arith.constant dense<0.000000e+00> : vector<8xf32>
      %149 = vector.multi_reduction <add>, %144, %cst_64 [1] : vector<8x32xf32> to vector<8xf32>
      %150 = vector.shape_cast %149 : vector<8xf32> to vector<8x1xf32>
      %cst_65 = arith.constant 3.200000e+01 : f32
      %151 = vector.broadcast %cst_65 : f32 to vector<8x1xf32>
      %152 = arith.divf %150, %151 : vector<8x1xf32>
      %153 = vector.broadcast %152 : vector<8x1xf32> to vector<8x32xf32>
      %154 = arith.subf %144, %153 : vector<8x32xf32>
      %155 = arith.mulf %154, %154 : vector<8x32xf32>
      %cst_66 = arith.constant dense<0.000000e+00> : vector<8xf32>
      %156 = vector.multi_reduction <add>, %155, %cst_66 [1] : vector<8x32xf32> to vector<8xf32>
      %157 = vector.shape_cast %156 : vector<8xf32> to vector<8x1xf32>
      %cst_67 = arith.constant 3.200000e+01 : f32
      %158 = vector.broadcast %cst_67 : f32 to vector<8x1xf32>
      %159 = arith.divf %157, %158 : vector<8x1xf32>
      %160 = vector.broadcast %152 : vector<8x1xf32> to vector<8x32xf32>
      %161 = arith.subf %144, %160 : vector<8x32xf32>
      %cst_68 = arith.constant 9.99999974E-6 : f32
      %162 = vector.broadcast %cst_68 : f32 to vector<8x1xf32>
      %163 = arith.addf %159, %162 : vector<8x1xf32>
      %164 = math.rsqrt %163 : vector<8x1xf32>
      %165 = vector.broadcast %164 : vector<8x1xf32> to vector<8x32xf32>
      %166 = arith.mulf %161, %165 : vector<8x32xf32>
      %167 = vector.shape_cast %146 : vector<32xf32> to vector<1x32xf32>
      %168 = vector.broadcast %167 : vector<1x32xf32> to vector<8x32xf32>
      %169 = arith.mulf %166, %168 : vector<8x32xf32>
      %170 = vector.shape_cast %148 : vector<32xf32> to vector<1x32xf32>
      %171 = vector.broadcast %170 : vector<1x32xf32> to vector<8x32xf32>
      %172 = arith.addf %169, %171 : vector<8x32xf32>
      %173 = arith.truncf %172 : vector<8x32xf32> to vector<8x32xbf16>
      %c0_69 = arith.constant 0 : index
      %c0_70 = arith.constant 0 : index
      %174 = vector.load %arg5[%c0_69, %c0_70] : memref<32x32xbf16, #tpu.memory_space<vmem>>, vector<32x32xbf16>
      %cst_71 = arith.constant dense<0.000000e+00> : vector<8x32xf32>
      %175 = tpu.matmul %173, %174, %cst_71 {dimension_numbers = #tpu.dot_dimension_numbers<[1], [0], [0], [1], [0, 0, 1, 1], [], []>} : vector<8x32xbf16>, vector<32x32xbf16>, vector<8x32xf32> -> vector<8x32xf32>
      %c0_72 = arith.constant 0 : index
      %c0_73 = arith.constant 0 : index
      %176 = vector.load %arg6[%c0_72, %c0_73] : memref<1x32xf32, #tpu.memory_space<vmem>>, vector<1x32xf32>
      %177 = vector.shape_cast %176 : vector<1x32xf32> to vector<32xf32>
      %178 = vector.shape_cast %177 : vector<32xf32> to vector<1x32xf32>
      %179 = vector.broadcast %178 : vector<1x32xf32> to vector<8x32xf32>
      %180 = arith.addf %175, %179 : vector<8x32xf32>
      %cst_74 = arith.constant 0.353553385 : f32
      %181 = vector.broadcast %cst_74 : f32 to vector<8x32xf32>
      %182 = arith.mulf %180, %181 : vector<8x32xf32>
      %183 = arith.truncf %182 : vector<8x32xf32> to vector<8x32xbf16>
      %c0_75 = arith.constant 0 : index
      %c0_76 = arith.constant 0 : index
      %184 = vector.load %arg20[%c0_75, %c0_76] : memref<8x32xbf16, #tpu.memory_space<vmem>>, vector<8x32xbf16>
      tpu.vector_store %arg20[%c0_75, %c0_76], %183 {strides = array<i32>} : memref<8x32xbf16, #tpu.memory_space<vmem>>, vector<8x32xbf16>,
      %c0_77 = arith.constant 0 : index
      %c0_78 = arith.constant 0 : index
      %185 = vector.load %arg7[%c0_77, %c0_78] : memref<32x32xbf16, #tpu.memory_space<vmem>>, vector<32x32xbf16>
      %cst_79 = arith.constant dense<0.000000e+00> : vector<8x32xf32>
      %186 = tpu.matmul %173, %185, %cst_79 {dimension_numbers = #tpu.dot_dimension_numbers<[1], [0], [0], [1], [0, 0, 1, 1], [], []>} : vector<8x32xbf16>, vector<32x32xbf16>, vector<8x32xf32> -> vector<8x32xf32>
      %c0_80 = arith.constant 0 : index
      %c0_81 = arith.constant 0 : index
      %187 = vector.load %arg8[%c0_80, %c0_81] : memref<1x32xf32, #tpu.memory_space<vmem>>, vector<1x32xf32>
      %188 = vector.shape_cast %187 : vector<1x32xf32> to vector<32xf32>
      %189 = vector.shape_cast %188 : vector<32xf32> to vector<1x32xf32>
      %190 = vector.broadcast %189 : vector<1x32xf32> to vector<8x32xf32>
      %191 = arith.addf %186, %190 : vector<8x32xf32>
      %192 = arith.truncf %191 : vector<8x32xf32> to vector<8x32xbf16>
      %c0_82 = arith.constant 0 : index
      %c0_83 = arith.constant 0 : index
      %193 = vector.load %arg21[%c0_82, %c0_83] : memref<8x32xbf16, #tpu.memory_space<vmem>>, vector<8x32xbf16>
      tpu.vector_store %arg21[%c0_82, %c0_83], %192 {strides = array<i32>} : memref<8x32xbf16, #tpu.memory_space<vmem>>, vector<8x32xbf16>,
      %c0_84 = arith.constant 0 : index
      %c0_85 = arith.constant 0 : index
      %194 = vector.load %arg9[%c0_84, %c0_85] : memref<32x32xbf16, #tpu.memory_space<vmem>>, vector<32x32xbf16>
      %cst_86 = arith.constant dense<0.000000e+00> : vector<8x32xf32>
      %195 = tpu.matmul %173, %194, %cst_86 {dimension_numbers = #tpu.dot_dimension_numbers<[1], [0], [0], [1], [0, 0, 1, 1], [], []>} : vector<8x32xbf16>, vector<32x32xbf16>, vector<8x32xf32> -> vector<8x32xf32>
      %c0_87 = arith.constant 0 : index
      %c0_88 = arith.constant 0 : index
      %196 = vector.load %arg10[%c0_87, %c0_88] : memref<1x32xf32, #tpu.memory_space<vmem>>, vector<1x32xf32>
      %197 = vector.shape_cast %196 : vector<1x32xf32> to vector<32xf32>
      %198 = vector.shape_cast %197 : vector<32xf32> to vector<1x32xf32>
      %199 = vector.broadcast %198 : vector<1x32xf32> to vector<8x32xf32>
      %200 = arith.addf %195, %199 : vector<8x32xf32>
      %201 = arith.truncf %200 : vector<8x32xf32> to vector<8x32xbf16>
      %c0_89 = arith.constant 0 : index
      %c0_90 = arith.constant 0 : index
      %202 = vector.load %arg22[%c0_89, %c0_90] : memref<8x32xbf16, #tpu.memory_space<vmem>>, vector<8x32xbf16>
      tpu.vector_store %arg22[%c0_89, %c0_90], %201 {strides = array<i32>} : memref<8x32xbf16, #tpu.memory_space<vmem>>, vector<8x32xbf16>,
    } else {
    }
    %c8_i32 = arith.constant 8 : i32
    %3 = arith.muli %arg1, %c8_i32 : i32
    %4 = tpu.assume_multiple %3, 8 : i32
    %c0 = arith.constant 0 : index
    %5 = arith.index_cast %4 : i32 to index
    %c0_1 = arith.constant 0 : index
    %6 = vector.load %arg2[%c0, %5, %c0_1] : memref<1x8x32xf32, #tpu.memory_space<vmem>>, vector<1x8x32xf32>
    %7 = vector.shape_cast %6 : vector<1x8x32xf32> to vector<8x32xf32>
    %8 = arith.index_cast %4 : i32 to index
    %c0_2 = arith.constant 0 : index
    %9 = vector.load %arg20[%8, %c0_2] : memref<8x32xbf16, #tpu.memory_space<vmem>>, vector<8x32xbf16>
    %c0_3 = arith.constant 0 : index
    %c0_4 = arith.constant 0 : index
    %10 = vector.load %arg21[%c0_3, %c0_4] : memref<8x32xbf16, #tpu.memory_space<vmem>>, vector<8x32xbf16>
    %c0_5 = arith.constant 0 : index
    %c0_6 = arith.constant 0 : index
    %11 = vector.load %arg22[%c0_5, %c0_6] : memref<8x32xbf16, #tpu.memory_space<vmem>>, vector<8x32xbf16>
    %12 = vector.extract_strided_slice %9 {offsets = [0, 0], sizes = [8, 8], strides = [1, 1]} : vector<8x32xbf16> to vector<8x8xbf16>
    %13 = vector.extract_strided_slice %10 {offsets = [0, 0], sizes = [8, 8], strides = [1, 1]} : vector<8x32xbf16> to vector<8x8xbf16>
    %14 = vector.extract_strided_slice %11 {offsets = [0, 0], sizes = [8, 8], strides = [1, 1]} : vector<8x32xbf16> to vector<8x8xbf16>
    %cst = arith.constant dense<0.000000e+00> : vector<8x8xf32>
    %15 = tpu.matmul %12, %13, %cst {dimension_numbers = #tpu.dot_dimension_numbers<[1], [1], [0], [0], [0, 0, 1, 0], [], []>} : vector<8x8xbf16>, vector<8x8xbf16>, vector<8x8xf32> -> vector<8x8xf32>
    %cst_7 = arith.constant dense<0xFF800000> : vector<8xf32>
    %16 = vector.multi_reduction <maximumf>, %15, %cst_7 [1] : vector<8x8xf32> to vector<8xf32>
    %17 = vector.shape_cast %16 : vector<8xf32> to vector<8x1xf32>
    %18 = vector.broadcast %17 : vector<8x1xf32> to vector<8x8xf32>
    %19 = arith.subf %15, %18 : vector<8x8xf32>
    %20 = math.exp %19 : vector<8x8xf32>
    %cst_8 = arith.constant dense<0.000000e+00> : vector<8xf32>
    %21 = vector.multi_reduction <add>, %20, %cst_8 [1] : vector<8x8xf32> to vector<8xf32>
    %22 = vector.shape_cast %21 : vector<8xf32> to vector<8x1xf32>
    %23 = tpu.reciprocal %22 {approx = true} : vector<8x1xf32> -> vector<8x1xf32>
    %24 = vector.broadcast %23 : vector<8x1xf32> to vector<8x8xf32>
    %25 = arith.mulf %20, %24 : vector<8x8xf32>
    %26 = arith.truncf %25 : vector<8x8xf32> to vector<8x8xbf16>
    %cst_9 = arith.constant dense<0.000000e+00> : vector<8x8xf32>
    %27 = tpu.matmul %26, %14, %cst_9 {dimension_numbers = #tpu.dot_dimension_numbers<[1], [0], [0], [1], [0, 0, 1, 1], [], []>} : vector<8x8xbf16>, vector<8x8xbf16>, vector<8x8xf32> -> vector<8x8xf32>
    %28 = arith.truncf %27 : vector<8x8xf32> to vector<8x8xbf16>
    %c0_10 = arith.constant 0 : index
    %c0_11 = arith.constant 0 : index
    %29 = vector.load %arg23[%c0_10, %c0_11] : memref<8x32xbf16, #tpu.memory_space<vmem>>, vector<8x8xbf16>
    tpu.vector_store %arg23[%c0_10, %c0_11], %28 {strides = array<i32>} : memref<8x32xbf16, #tpu.memory_space<vmem>>, vector<8x8xbf16>,
    %30 = vector.extract_strided_slice %9 {offsets = [0, 8], sizes = [8, 8], strides = [1, 1]} : vector<8x32xbf16> to vector<8x8xbf16>
    %31 = vector.extract_strided_slice %10 {offsets = [0, 8], sizes = [8, 8], strides = [1, 1]} : vector<8x32xbf16> to vector<8x8xbf16>
    %32 = vector.extract_strided_slice %11 {offsets = [0, 8], sizes = [8, 8], strides = [1, 1]} : vector<8x32xbf16> to vector<8x8xbf16>
    %cst_12 = arith.constant dense<0.000000e+00> : vector<8x8xf32>
    %33 = tpu.matmul %30, %31, %cst_12 {dimension_numbers = #tpu.dot_dimension_numbers<[1], [1], [0], [0], [0, 0, 1, 0], [], []>} : vector<8x8xbf16>, vector<8x8xbf16>, vector<8x8xf32> -> vector<8x8xf32>
    %cst_13 = arith.constant dense<0xFF800000> : vector<8xf32>
    %34 = vector.multi_reduction <maximumf>, %33, %cst_13 [1] : vector<8x8xf32> to vector<8xf32>
    %35 = vector.shape_cast %34 : vector<8xf32> to vector<8x1xf32>
    %36 = vector.broadcast %35 : vector<8x1xf32> to vector<8x8xf32>
    %37 = arith.subf %33, %36 : vector<8x8xf32>
    %38 = math.exp %37 : vector<8x8xf32>
    %cst_14 = arith.constant dense<0.000000e+00> : vector<8xf32>
    %39 = vector.multi_reduction <add>, %38, %cst_14 [1] : vector<8x8xf32> to vector<8xf32>
    %40 = vector.shape_cast %39 : vector<8xf32> to vector<8x1xf32>
    %41 = tpu.reciprocal %40 {approx = true} : vector<8x1xf32> -> vector<8x1xf32>
    %42 = vector.broadcast %41 : vector<8x1xf32> to vector<8x8xf32>
    %43 = arith.mulf %38, %42 : vector<8x8xf32>
    %44 = arith.truncf %43 : vector<8x8xf32> to vector<8x8xbf16>
    %cst_15 = arith.constant dense<0.000000e+00> : vector<8x8xf32>
    %45 = tpu.matmul %44, %32, %cst_15 {dimension_numbers = #tpu.dot_dimension_numbers<[1], [0], [0], [1], [0, 0, 1, 1], [], []>} : vector<8x8xbf16>, vector<8x8xbf16>, vector<8x8xf32> -> vector<8x8xf32>
    %46 = arith.truncf %45 : vector<8x8xf32> to vector<8x8xbf16>
    %c0_16 = arith.constant 0 : index
    %c8 = arith.constant 8 : index
    %47 = vector.load %arg23[%c0_16, %c8] : memref<8x32xbf16, #tpu.memory_space<vmem>>, vector<8x8xbf16>
    tpu.vector_store %arg23[%c0_16, %c8], %46 {strides = array<i32>} : memref<8x32xbf16, #tpu.memory_space<vmem>>, vector<8x8xbf16>,
    %48 = vector.extract_strided_slice %9 {offsets = [0, 16], sizes = [8, 8], strides = [1, 1]} : vector<8x32xbf16> to vector<8x8xbf16>
    %49 = vector.extract_strided_slice %10 {offsets = [0, 16], sizes = [8, 8], strides = [1, 1]} : vector<8x32xbf16> to vector<8x8xbf16>
    %50 = vector.extract_strided_slice %11 {offsets = [0, 16], sizes = [8, 8], strides = [1, 1]} : vector<8x32xbf16> to vector<8x8xbf16>
    %cst_17 = arith.constant dense<0.000000e+00> : vector<8x8xf32>
    %51 = tpu.matmul %48, %49, %cst_17 {dimension_numbers = #tpu.dot_dimension_numbers<[1], [1], [0], [0], [0, 0, 1, 0], [], []>} : vector<8x8xbf16>, vector<8x8xbf16>, vector<8x8xf32> -> vector<8x8xf32>
    %cst_18 = arith.constant dense<0xFF800000> : vector<8xf32>
    %52 = vector.multi_reduction <maximumf>, %51, %cst_18 [1] : vector<8x8xf32> to vector<8xf32>
    %53 = vector.shape_cast %52 : vector<8xf32> to vector<8x1xf32>
    %54 = vector.broadcast %53 : vector<8x1xf32> to vector<8x8xf32>
    %55 = arith.subf %51, %54 : vector<8x8xf32>
    %56 = math.exp %55 : vector<8x8xf32>
    %cst_19 = arith.constant dense<0.000000e+00> : vector<8xf32>
    %57 = vector.multi_reduction <add>, %56, %cst_19 [1] : vector<8x8xf32> to vector<8xf32>
    %58 = vector.shape_cast %57 : vector<8xf32> to vector<8x1xf32>
    %59 = tpu.reciprocal %58 {approx = true} : vector<8x1xf32> -> vector<8x1xf32>
    %60 = vector.broadcast %59 : vector<8x1xf32> to vector<8x8xf32>
    %61 = arith.mulf %56, %60 : vector<8x8xf32>
    %62 = arith.truncf %61 : vector<8x8xf32> to vector<8x8xbf16>
    %cst_20 = arith.constant dense<0.000000e+00> : vector<8x8xf32>
    %63 = tpu.matmul %62, %50, %cst_20 {dimension_numbers = #tpu.dot_dimension_numbers<[1], [0], [0], [1], [0, 0, 1, 1], [], []>} : vector<8x8xbf16>, vector<8x8xbf16>, vector<8x8xf32> -> vector<8x8xf32>
    %64 = arith.truncf %63 : vector<8x8xf32> to vector<8x8xbf16>
    %c0_21 = arith.constant 0 : index
    %c16 = arith.constant 16 : index
    %65 = vector.load %arg23[%c0_21, %c16] : memref<8x32xbf16, #tpu.memory_space<vmem>>, vector<8x8xbf16>
    tpu.vector_store %arg23[%c0_21, %c16], %64 {strides = array<i32>} : memref<8x32xbf16, #tpu.memory_space<vmem>>, vector<8x8xbf16>,
    %66 = vector.extract_strided_slice %9 {offsets = [0, 24], sizes = [8, 8], strides = [1, 1]} : vector<8x32xbf16> to vector<8x8xbf16>
    %67 = vector.extract_strided_slice %10 {offsets = [0, 24], sizes = [8, 8], strides = [1, 1]} : vector<8x32xbf16> to vector<8x8xbf16>
    %68 = vector.extract_strided_slice %11 {offsets = [0, 24], sizes = [8, 8], strides = [1, 1]} : vector<8x32xbf16> to vector<8x8xbf16>
    %cst_22 = arith.constant dense<0.000000e+00> : vector<8x8xf32>
    %69 = tpu.matmul %66, %67, %cst_22 {dimension_numbers = #tpu.dot_dimension_numbers<[1], [1], [0], [0], [0, 0, 1, 0], [], []>} : vector<8x8xbf16>, vector<8x8xbf16>, vector<8x8xf32> -> vector<8x8xf32>
    %cst_23 = arith.constant dense<0xFF800000> : vector<8xf32>
    %70 = vector.multi_reduction <maximumf>, %69, %cst_23 [1] : vector<8x8xf32> to vector<8xf32>
    %71 = vector.shape_cast %70 : vector<8xf32> to vector<8x1xf32>
    %72 = vector.broadcast %71 : vector<8x1xf32> to vector<8x8xf32>
    %73 = arith.subf %69, %72 : vector<8x8xf32>
    %74 = math.exp %73 : vector<8x8xf32>
    %cst_24 = arith.constant dense<0.000000e+00> : vector<8xf32>
    %75 = vector.multi_reduction <add>, %74, %cst_24 [1] : vector<8x8xf32> to vector<8xf32>
    %76 = vector.shape_cast %75 : vector<8xf32> to vector<8x1xf32>
    %77 = tpu.reciprocal %76 {approx = true} : vector<8x1xf32> -> vector<8x1xf32>
    %78 = vector.broadcast %77 : vector<8x1xf32> to vector<8x8xf32>
    %79 = arith.mulf %74, %78 : vector<8x8xf32>
    %80 = arith.truncf %79 : vector<8x8xf32> to vector<8x8xbf16>
    %cst_25 = arith.constant dense<0.000000e+00> : vector<8x8xf32>
    %81 = tpu.matmul %80, %68, %cst_25 {dimension_numbers = #tpu.dot_dimension_numbers<[1], [0], [0], [1], [0, 0, 1, 1], [], []>} : vector<8x8xbf16>, vector<8x8xbf16>, vector<8x8xf32> -> vector<8x8xf32>
    %82 = arith.truncf %81 : vector<8x8xf32> to vector<8x8xbf16>
    %c0_26 = arith.constant 0 : index
    %c24 = arith.constant 24 : index
    %83 = vector.load %arg23[%c0_26, %c24] : memref<8x32xbf16, #tpu.memory_space<vmem>>, vector<8x8xbf16>
    tpu.vector_store %arg23[%c0_26, %c24], %82 {strides = array<i32>} : memref<8x32xbf16, #tpu.memory_space<vmem>>, vector<8x8xbf16>,
    %c0_27 = arith.constant 0 : index
    %c0_28 = arith.constant 0 : index
    %84 = vector.load %arg23[%c0_27, %c0_28] : memref<8x32xbf16, #tpu.memory_space<vmem>>, vector<8x32xbf16>
    %c0_29 = arith.constant 0 : index
    %c0_30 = arith.constant 0 : index
    %85 = vector.load %arg11[%c0_29, %c0_30] : memref<32x32xbf16, #tpu.memory_space<vmem>>, vector<32x32xbf16>
    %cst_31 = arith.constant dense<0.000000e+00> : vector<8x32xf32>
    %86 = tpu.matmul %84, %85, %cst_31 {dimension_numbers = #tpu.dot_dimension_numbers<[1], [0], [0], [1], [0, 0, 1, 1], [], []>} : vector<8x32xbf16>, vector<32x32xbf16>, vector<8x32xf32> -> vector<8x32xf32>
    %c0_32 = arith.constant 0 : index
    %c0_33 = arith.constant 0 : index
    %87 = vector.load %arg12[%c0_32, %c0_33] : memref<1x32xf32, #tpu.memory_space<vmem>>, vector<1x32xf32>
    %88 = vector.shape_cast %87 : vector<1x32xf32> to vector<32xf32>
    %89 = vector.shape_cast %88 : vector<32xf32> to vector<1x32xf32>
    %90 = vector.broadcast %89 : vector<1x32xf32> to vector<8x32xf32>
    %91 = arith.addf %86, %90 : vector<8x32xf32>
    %92 = arith.addf %7, %91 : vector<8x32xf32>
    %c0_34 = arith.constant 0 : index
    %c0_35 = arith.constant 0 : index
    %93 = vector.load %arg13[%c0_34, %c0_35] : memref<1x32xf32, #tpu.memory_space<vmem>>, vector<1x32xf32>
    %94 = vector.shape_cast %93 : vector<1x32xf32> to vector<32xf32>
    %c0_36 = arith.constant 0 : index
    %c0_37 = arith.constant 0 : index
    %95 = vector.load %arg14[%c0_36, %c0_37] : memref<1x32xf32, #tpu.memory_space<vmem>>, vector<1x32xf32>
    %96 = vector.shape_cast %95 : vector<1x32xf32> to vector<32xf32>
    %cst_38 = arith.constant dense<0.000000e+00> : vector<8xf32>
    %97 = vector.multi_reduction <add>, %92, %cst_38 [1] : vector<8x32xf32> to vector<8xf32>
    %98 = vector.shape_cast %97 : vector<8xf32> to vector<8x1xf32>
    %cst_39 = arith.constant 3.200000e+01 : f32
    %99 = vector.broadcast %cst_39 : f32 to vector<8x1xf32>
    %100 = arith.divf %98, %99 : vector<8x1xf32>
    %101 = vector.broadcast %100 : vector<8x1xf32> to vector<8x32xf32>
    %102 = arith.subf %92, %101 : vector<8x32xf32>
    %103 = arith.mulf %102, %102 : vector<8x32xf32>
    %cst_40 = arith.constant dense<0.000000e+00> : vector<8xf32>
    %104 = vector.multi_reduction <add>, %103, %cst_40 [1] : vector<8x32xf32> to vector<8xf32>
    %105 = vector.shape_cast %104 : vector<8xf32> to vector<8x1xf32>
    %cst_41 = arith.constant 3.200000e+01 : f32
    %106 = vector.broadcast %cst_41 : f32 to vector<8x1xf32>
    %107 = arith.divf %105, %106 : vector<8x1xf32>
    %108 = vector.broadcast %100 : vector<8x1xf32> to vector<8x32xf32>
    %109 = arith.subf %92, %108 : vector<8x32xf32>
    %cst_42 = arith.constant 9.99999974E-6 : f32
    %110 = vector.broadcast %cst_42 : f32 to vector<8x1xf32>
    %111 = arith.addf %107, %110 : vector<8x1xf32>
    %112 = math.rsqrt %111 : vector<8x1xf32>
    %113 = vector.broadcast %112 : vector<8x1xf32> to vector<8x32xf32>
    %114 = arith.mulf %109, %113 : vector<8x32xf32>
    %115 = vector.shape_cast %94 : vector<32xf32> to vector<1x32xf32>
    %116 = vector.broadcast %115 : vector<1x32xf32> to vector<8x32xf32>
    %117 = arith.mulf %114, %116 : vector<8x32xf32>
    %118 = vector.shape_cast %96 : vector<32xf32> to vector<1x32xf32>
    %119 = vector.broadcast %118 : vector<1x32xf32> to vector<8x32xf32>
    %120 = arith.addf %117, %119 : vector<8x32xf32>
    %121 = arith.truncf %120 : vector<8x32xf32> to vector<8x32xbf16>
    %c0_43 = arith.constant 0 : index
    %c0_44 = arith.constant 0 : index
    %122 = vector.load %arg15[%c0_43, %c0_44] : memref<32x64xbf16, #tpu.memory_space<vmem>>, vector<32x64xbf16>
    %cst_45 = arith.constant dense<0.000000e+00> : vector<8x64xf32>
    %123 = tpu.matmul %121, %122, %cst_45 {dimension_numbers = #tpu.dot_dimension_numbers<[1], [0], [0], [1], [0, 0, 1, 1], [], []>} : vector<8x32xbf16>, vector<32x64xbf16>, vector<8x64xf32> -> vector<8x64xf32>
    %c0_46 = arith.constant 0 : index
    %c0_47 = arith.constant 0 : index
    %124 = vector.load %arg16[%c0_46, %c0_47] : memref<1x64xf32, #tpu.memory_space<vmem>>, vector<1x64xf32>
    %125 = vector.shape_cast %124 : vector<1x64xf32> to vector<64xf32>
    %126 = vector.shape_cast %125 : vector<64xf32> to vector<1x64xf32>
    %127 = vector.broadcast %126 : vector<1x64xf32> to vector<8x64xf32>
    %128 = arith.addf %123, %127 : vector<8x64xf32>
    %cst_48 = arith.constant 0.000000e+00 : f32
    %129 = vector.broadcast %cst_48 : f32 to vector<8x64xf32>
    %130 = arith.maximumf %128, %129 : vector<8x64xf32>
    %131 = arith.truncf %130 : vector<8x64xf32> to vector<8x64xbf16>
    %c0_49 = arith.constant 0 : index
    %c0_50 = arith.constant 0 : index
    %132 = vector.load %arg17[%c0_49, %c0_50] : memref<64x32xbf16, #tpu.memory_space<vmem>>, vector<64x32xbf16>
    %cst_51 = arith.constant dense<0.000000e+00> : vector<8x32xf32>
    %133 = tpu.matmul %131, %132, %cst_51 {dimension_numbers = #tpu.dot_dimension_numbers<[1], [0], [0], [1], [0, 0, 1, 1], [], []>} : vector<8x64xbf16>, vector<64x32xbf16>, vector<8x32xf32> -> vector<8x32xf32>
    %c0_52 = arith.constant 0 : index
    %c0_53 = arith.constant 0 : index
    %134 = vector.load %arg18[%c0_52, %c0_53] : memref<1x32xf32, #tpu.memory_space<vmem>>, vector<1x32xf32>
    %135 = vector.shape_cast %134 : vector<1x32xf32> to vector<32xf32>
    %136 = vector.shape_cast %135 : vector<32xf32> to vector<1x32xf32>
    %137 = vector.broadcast %136 : vector<1x32xf32> to vector<8x32xf32>
    %138 = arith.addf %133, %137 : vector<8x32xf32>
    %139 = arith.addf %92, %138 : vector<8x32xf32>
    %c0_54 = arith.constant 0 : index
    %c0_55 = arith.constant 0 : index
    %c0_56 = arith.constant 0 : index
    %140 = vector.load %arg19[%c0_54, %c0_55, %c0_56] : memref<1x8x32xf32, #tpu.memory_space<vmem>>, vector<1x8x32xf32>
    %141 = vector.shape_cast %140 : vector<1x8x32xf32> to vector<8x32xf32>
    %142 = vector.shape_cast %139 : vector<8x32xf32> to vector<1x8x32xf32>
    tpu.vector_store %arg19[%c0_54, %c0_55, %c0_56], %142 {strides = array<i32>} : memref<1x8x32xf32, #tpu.memory_space<vmem>>, vector<1x8x32xf32>,
    return
  }
  func.func @transform_0(%arg0: i32, %arg1: i32) -> (i32, i32, i32) {
    %c0_i32 = arith.constant 0 : i32
    %c0_i32_0 = arith.constant 0 : i32
    %c0_i32_1 = arith.constant 0 : i32
    return %arg0, %c0_i32, %c0_i32_0 : i32, i32, i32
  }
  func.func @transform_1(%arg0: i32, %arg1: i32) -> (i32, i32) {
    %c0_i32 = arith.constant 0 : i32
    %c0_i32_0 = arith.constant 0 : i32
    %c0_i32_1 = arith.constant 0 : i32
    return %c0_i32, %c0_i32_0 : i32, i32
  }
  func.func @transform_2(%arg0: i32, %arg1: i32) -> (i32, i32) {
    %c0_i32 = arith.constant 0 : i32
    %c0_i32_0 = arith.constant 0 : i32
    %c0_i32_1 = arith.constant 0 : i32
    return %c0_i32, %c0_i32_0 : i32, i32
  }
  func.func @transform_3(%arg0: i32, %arg1: i32) -> (i32, i32) {
    %c0_i32 = arith.constant 0 : i32
    %c0_i32_0 = arith.constant 0 : i32
    %c0_i32_1 = arith.constant 0 : i32
    return %c0_i32, %c0_i32_0 : i32, i32
  }
  func.func @transform_4(%arg0: i32, %arg1: i32) -> (i32, i32) {
    %c0_i32 = arith.constant 0 : i32
    %c0_i32_0 = arith.constant 0 : i32
    %c0_i32_1 = arith.constant 0 : i32
    return %c0_i32, %c0_i32_0 : i32, i32
  }
  func.func @transform_5(%arg0: i32, %arg1: i32) -> (i32, i32) {
    %c0_i32 = arith.constant 0 : i32
    %c0_i32_0 = arith.constant 0 : i32
    %c0_i32_1 = arith.constant 0 : i32
    return %c0_i32, %c0_i32_0 : i32, i32
  }
  func.func @transform_6(%arg0: i32, %arg1: i32) -> (i32, i32) {
    %c0_i32 = arith.constant 0 : i32
    %c0_i32_0 = arith.constant 0 : i32
    %c0_i32_1 = arith.constant 0 : i32
    return %c0_i32, %c0_i32_0 : i32, i32
  }
  func.func @transform_7(%arg0: i32, %arg1: i32) -> (i32, i32) {
    %c0_i32 = arith.constant 0 : i32
    %c0_i32_0 = arith.constant 0 : i32
    %c0_i32_1 = arith.constant 0 : i32
    return %c0_i32, %c0_i32_0 : i32, i32
  }
  func.func @transform_8(%arg0: i32, %arg1: i32) -> (i32, i32) {
    %c0_i32 = arith.constant 0 : i32
    %c0_i32_0 = arith.constant 0 : i32
    %c0_i32_1 = arith.constant 0 : i32
    return %c0_i32, %c0_i32_0 : i32, i32
  }
  func.func @transform_9(%arg0: i32, %arg1: i32) -> (i32, i32) {
    %c0_i32 = arith.constant 0 : i32
    %c0_i32_0 = arith.constant 0 : i32
    %c0_i32_1 = arith.constant 0 : i32
    return %c0_i32, %c0_i32_0 : i32, i32
  }
  func.func @transform_10(%arg0: i32, %arg1: i32) -> (i32, i32) {
    %c0_i32 = arith.constant 0 : i32
    %c0_i32_0 = arith.constant 0 : i32
    %c0_i32_1 = arith.constant 0 : i32
    return %c0_i32, %c0_i32_0 : i32, i32
  }
  func.func @transform_11(%arg0: i32, %arg1: i32) -> (i32, i32) {
    %c0_i32 = arith.constant 0 : i32
    %c0_i32_0 = arith.constant 0 : i32
    %c0_i32_1 = arith.constant 0 : i32
    return %c0_i32, %c0_i32_0 : i32, i32
  }
  func.func @transform_12(%arg0: i32, %arg1: i32) -> (i32, i32) {
    %c0_i32 = arith.constant 0 : i32
    %c0_i32_0 = arith.constant 0 : i32
    %c0_i32_1 = arith.constant 0 : i32
    return %c0_i32, %c0_i32_0 : i32, i32
  }
  func.func @transform_13(%arg0: i32, %arg1: i32) -> (i32, i32) {
    %c0_i32 = arith.constant 0 : i32
    %c0_i32_0 = arith.constant 0 : i32
    %c0_i32_1 = arith.constant 0 : i32
    return %c0_i32, %c0_i32_0 : i32, i32
  }
  func.func @transform_14(%arg0: i32, %arg1: i32) -> (i32, i32) {
    %c0_i32 = arith.constant 0 : i32
    %c0_i32_0 = arith.constant 0 : i32
    %c0_i32_1 = arith.constant 0 : i32
    return %c0_i32, %c0_i32_0 : i32, i32
  }
  func.func @transform_15(%arg0: i32, %arg1: i32) -> (i32, i32) {
    %c0_i32 = arith.constant 0 : i32
    %c0_i32_0 = arith.constant 0 : i32
    %c0_i32_1 = arith.constant 0 : i32
    return %c0_i32, %c0_i32_0 : i32, i32
  }
  func.func @transform_16(%arg0: i32, %arg1: i32) -> (i32, i32) {
    %c0_i32 = arith.constant 0 : i32
    %c0_i32_0 = arith.constant 0 : i32
    %c0_i32_1 = arith.constant 0 : i32
    return %c0_i32, %c0_i32_0 : i32, i32
  }
  func.func @transform_17(%arg0: i32, %arg1: i32) -> (i32, i32, i32) {
    %c0_i32 = arith.constant 0 : i32
    %c0_i32_0 = arith.constant 0 : i32
    return %arg0, %arg1, %c0_i32 : i32, i32, i32
  }
}

</mosaic_0001>

<llo_original>
// kernel: tpu_custom_call.1
$region0: #{tpu_custom_call.1}
  #allocation0 [shape = 'u32[]', space=smem, size = 0x4, offset = 0x4, fixed_abs, tag = 'smem constant byte address 0x4 - core index']
  #allocation1 [shape = 'u32[144,128]{1,0:T(1,128)}', space=vmem, size = 0x12000, scoped, tag = 'internal scratch']
  #allocation2 [shape = 'bf16[8,32]{1,0:T(8,128)(2,1)}', space=vmem, size = 0x800, scoped, tag = 'scratch operand']
  #allocation3 [shape = 'bf16[8,32]{1,0:T(8,128)(2,1)}', space=vmem, size = 0x800, scoped, tag = 'scratch operand']
  #allocation4 [shape = 'bf16[8,32]{1,0:T(8,128)(2,1)}', space=vmem, size = 0x800, scoped, tag = 'scratch operand']
  #allocation5 [shape = 'bf16[8,32]{1,0:T(8,128)(2,1)}', space=vmem, size = 0x800, scoped, tag = 'scratch operand']
  %s0 = inlined_call_operand.vmem [shape: f32[2,8,32], index: 0, kind: input, shape index: {}]
  %s1 = inlined_call_operand.vmem [shape: f32[1,32], index: 1, kind: input, shape index: {}]
  %s2 = inlined_call_operand.hbm [shape: f32[1,32], index: 2, kind: input, shape index: {}]
  %s3 = inlined_call_operand.vmem [shape: bf16[32,32], index: 3, kind: input, shape index: {}]
  %s4 = inlined_call_operand.hbm [shape: f32[1,32], index: 4, kind: input, shape index: {}]
  %s5 = inlined_call_operand.vmem [shape: bf16[32,32], index: 5, kind: input, shape index: {}]
  %s6 = inlined_call_operand.hbm [shape: f32[1,32], index: 6, kind: input, shape index: {}]
  %s7 = inlined_call_operand.hbm [shape: bf16[32,32], index: 7, kind: input, shape index: {}]
  %s8 = inlined_call_operand.hbm [shape: f32[1,32], index: 8, kind: input, shape index: {}]
  %s9 = inlined_call_operand.vmem [shape: bf16[32,32], index: 9, kind: input, shape index: {}]
  %s10 = inlined_call_operand.hbm [shape: f32[1,32], index: 10, kind: input, shape index: {}]
  %s11 = inlined_call_operand.hbm [shape: f32[1,32], index: 11, kind: input, shape index: {}]
  %s12 = inlined_call_operand.hbm [shape: f32[1,32], index: 12, kind: input, shape index: {}]
  %s13 = inlined_call_operand.vmem [shape: bf16[32,64], index: 13, kind: input, shape index: {}]
  %s14 = inlined_call_operand.vmem [shape: f32[1,64], index: 14, kind: input, shape index: {}]
  %s15 = inlined_call_operand.vmem [shape: bf16[64,32], index: 15, kind: input, shape index: {}]
  %s16 = inlined_call_operand.vmem [shape: f32[1,32], index: 16, kind: input, shape index: {}]
  %s17 = inlined_call_operand.hbm [shape: f32[2,8,32], index: 17, kind: output, shape index: {}]
  %s18 = sld [smem:[#allocation0]]
  $region137: #{tpu_custom_call.1} parent=0
    _
  %s20 = ssub.s32 1, %s18
  %s21 = scalar_select 0, %s20, %s18
  $region1: #{tpu_custom_call.1} parent=0
    #allocation6 [shape = 'u8[512]{0}', space=vmem, size = 0x400, scoped, tag = 'input window, operand 2, single buffered']
    #allocation7 [shape = 's32[2]{0}', space=sflag, size = 0x8, scoped, tag = 'scoped memory for tpu_custom_call.1']
    #allocation8 [shape = 's32[2]{0}', space=sflag, size = 0x8, scoped, tag = 'scoped memory for tpu_custom_call.1']
    #allocation9 [shape = 'u8[512]{0}', space=vmem, size = 0x400, scoped, tag = 'input window, operand 4, single buffered']
    #allocation10 [shape = 's32[1]{0}', space=sflag, size = 0x4, scoped, tag = 'scoped memory for tpu_custom_call.1']
    #allocation11 [shape = 'u8[512]{0}', space=vmem, size = 0x400, scoped, tag = 'input window, operand 6, single buffered']
    #allocation12 [shape = 'u8[8192]{0}', space=vmem, size = 0x2000, scoped, tag = 'input window, operand 7, single buffered']
    #allocation13 [shape = 's32[1]{0}', space=sflag, size = 0x4, scoped, tag = 'scoped memory for tpu_custom_call.1']
    #allocation14 [shape = 'u8[512]{0}', space=vmem, size = 0x400, scoped, tag = 'input window, operand 8, single buffered']
    #allocation15 [shape = 'u8[512]{0}', space=vmem, size = 0x400, scoped, tag = 'input window, operand 10, single buffered']
    #allocation16 [shape = 's32[1]{0}', space=sflag, size = 0x4, scoped, tag = 'scoped memory for tpu_custom_call.1']
    #allocation17 [shape = 'u8[512]{0}', space=vmem, size = 0x400, scoped, tag = 'input window, operand 11, single buffered']
    #allocation18 [shape = 'u8[512]{0}', space=vmem, size = 0x400, scoped, tag = 'input window, operand 12, single buffered']
    #allocation19 [shape = 's32[1]{0}', space=sflag, size = 0x4, scoped, tag = 'scoped memory for tpu_custom_call.1']
    #allocation20 [shape = 'u8[8192]{0}', space=vmem, size = 0x2000, scoped, tag = 'output window, operand 0']
    %22 = vsyncpa [#allocation7], 0
    %23 = vsyncpa [#allocation10], 0
    %24 = vsyncpa [#allocation13], 0
    %25 = vsyncpa [#allocation16], 0
    %26 = vsyncpa [#allocation19], 0
    %27 = vsyncpa [#allocation8], 0
    %s28 = scalar_lea.sflag [#allocation8], 1
    %29 = vsyncpa %s28, 0
    loop: start=0, step=1, limit=4
    $region2: #{tpu_custom_call.1} parent=1 // loop_pre_header
      _
    $region3: #{tpu_custom_call.1} parent=1 // loop_header
      %s31 = sphi 0, %s35
      %p32 = scmp.ge.s32.totalorder %s31, 4
      %s38 = sphi 0, %s50
      %s39 = sphi 0, %s46
      %s40 = sphi 0, %s38
      %s41 = sphi 0, %s39
      %s42 = sphi 0, %s40
      %s43 = sphi 0, %s41
      %s53 = sphi 0, %s55
      %s56 = sphi 0, %s53
      %s57 = sphi 0, %s56
      %s73 = sphi 0, %s57
      %s77 = sphi 0, %s77
      %s79 = sphi 0, %s77
      %s80 = sphi 0, %s79
      %s94 = sphi 0, %s80
      %s98 = sphi 0, %s98
      %s100 = sphi 0, %s98
      %s101 = sphi 0, %s100
      %s115 = sphi 0, %s101
      %s119 = sphi 0, %s119
      %s121 = sphi 0, %s119
      %s122 = sphi 0, %s121
      %s136 = sphi 0, %s122
      %s140 = sphi 0, %s140
      %s142 = sphi 0, %s140
      %s143 = sphi 0, %s142
      %s157 = sphi 0, %s143
      %s161 = sphi 0, %s161
      %s163 = sphi 0, %s161
      %s164 = sphi 0, %s163
      %s178 = sphi 0, %s164
      %s182 = sphi 0, %s182
      %s184 = sphi 0, %s182
      %s185 = sphi 0, %s184
      %s199 = sphi 0, %s185
      %s203 = sphi 0, %s203
      %s205 = sphi 0, %s203
      %s206 = sphi 0, %s205
      %s220 = sphi 0, %s206
      %s224 = sphi 0, %s224
      %s226 = sphi 0, %s224
      %s227 = sphi 0, %s226
      %s241 = sphi 0, %s227
      %s245 = sphi 0, %s245
      %s247 = sphi 0, %s245
      %s248 = sphi 0, %s247
      %s262 = sphi 0, %s248
      %s266 = sphi 0, %s266
      %s268 = sphi 0, %s266
      %s269 = sphi 0, %s268
      %s283 = sphi 0, %s269
      %s287 = sphi 0, %s287
      %s289 = sphi 0, %s287
      %s290 = sphi 0, %s289
      %s304 = sphi 0, %s290
      %s308 = sphi 0, %s308
      %s310 = sphi 0, %s308
      %s311 = sphi 0, %s310
      %s325 = sphi 0, %s311
      %s329 = sphi 0, %s329
      %s331 = sphi 0, %s329
      %s332 = sphi 0, %s331
      %s346 = sphi 0, %s332
      %s350 = sphi 0, %s350
      %s352 = sphi 0, %s350
      %s353 = sphi 0, %s352
      %s367 = sphi 0, %s353
      %s371 = sphi 0, %s371
      %s373 = sphi 0, %s371
      %s374 = sphi 0, %s373
      %s388 = sphi 0, %s374
      %s392 = sphi 0, %s392
      %s394 = sphi 0, %s392
      %s395 = sphi 0, %s394
      %s409 = sphi 0, %s395
      %s417 = sphi 0, %s419
      %s420 = sphi 0, %s417
      %s421 = sphi 0, %s420
      %s437 = sphi 0, %s421
    $region4: #{tpu_custom_call.1} parent=1 // loop_header_branch
      %34 = sbr.rel (%p32) target = $region8
    $region5: #{tpu_custom_call.1} parent=1 // loop_body
      %s36 = ssub.s32 %s31, 1
      %s37 = ssub.s32 %s31, 2
      %s44 = sadd.s32 1, %s39
      %p45 = scmp.ge.s32.totalorder %s44, 1
      %s46 = scalar_select %p45, 0, %s44
      %s47 = sadd.s32 1, %s38
      %s48 = scalar_select %p45, %s47, %s38
      %p49 = scmp.ge.s32.totalorder %s48, 2
      %s50 = scalar_select %p49, 0, %s48
      %s51 = ssub.s32 %s38, %s50
      %p52 = scmp.eq.s32.totalorder %s51, 0
      %s54 = sadd.s32 %s53, 1
      %s55 = scalar_select %p52, %s53, %s54
      %p58 = pneg %p52
      %p59 = scmp.eq.s32.totalorder %s31, 1
      %p60 = por %p58, %p59
      %p61 = scmp.ne.s32.totalorder %s53, %s56
      %p62 = scmp.eq.s32.totalorder %s31, 0
      %p63 = por %p61, %p62
      %p64 = scmp.ne.s32.totalorder %s53, %s56
      %p65 = scmp.eq.s32.totalorder %s36, 1
      %p66 = por %p64, %p65
      %p67 = scmp.ne.s32.totalorder %s56, %s57
      %p68 = scmp.eq.s32.totalorder %s36, 0
      %p69 = por %p67, %p68
      %p70 = scmp.ne.s32.totalorder %s56, %s57
      %p71 = scmp.eq.s32.totalorder %s37, 1
      %p72 = por %p70, %p71
      %p74 = scmp.ne.s32.totalorder %s57, %s73
      %p75 = scmp.eq.s32.totalorder %s37, 0
      %p76 = por %p74, %p75
      %s78 = sadd.s32 %s77, 1
      %p81 = scmp.eq.s32.totalorder %s31, 1
      %p82 = scmp.ne.s32.totalorder %s77, %s79
      %p83 = scmp.eq.s32.totalorder %s31, 0
      %p84 = por %p82, %p83
      %p85 = scmp.ne.s32.totalorder %s77, %s79
      %p86 = scmp.eq.s32.totalorder %s36, 1
      %p87 = por %p85, %p86
      %p88 = scmp.ne.s32.totalorder %s79, %s80
      %p89 = scmp.eq.s32.totalorder %s36, 0
      %p90 = por %p88, %p89
      %p91 = scmp.ne.s32.totalorder %s79, %s80
      %p92 = scmp.eq.s32.totalorder %s37, 1
      %p93 = por %p91, %p92
      %p95 = scmp.ne.s32.totalorder %s80, %s94
      %p96 = scmp.eq.s32.totalorder %s37, 0
      %p97 = por %p95, %p96
      %s99 = sadd.s32 %s98, 1
      %p102 = scmp.eq.s32.totalorder %s31, 1
      %p103 = scmp.ne.s32.totalorder %s98, %s100
      %p104 = scmp.eq.s32.totalorder %s31, 0
      %p105 = por %p103, %p104
      %p106 = scmp.ne.s32.totalorder %s98, %s100
      %p107 = scmp.eq.s32.totalorder %s36, 1
      %p108 = por %p106, %p107
      %p109 = scmp.ne.s32.totalorder %s100, %s101
      %p110 = scmp.eq.s32.totalorder %s36, 0
      %p111 = por %p109, %p110
      %p112 = scmp.ne.s32.totalorder %s100, %s101
      %p113 = scmp.eq.s32.totalorder %s37, 1
      %p114 = por %p112, %p113
      %p116 = scmp.ne.s32.totalorder %s101, %s115
      %p117 = scmp.eq.s32.totalorder %s37, 0
      %p118 = por %p116, %p117
      %s120 = sadd.s32 %s119, 1
      %p123 = scmp.eq.s32.totalorder %s31, 1
      %p124 = scmp.ne.s32.totalorder %s119, %s121
      %p125 = scmp.eq.s32.totalorder %s31, 0
      %p126 = por %p124, %p125
      %p127 = scmp.ne.s32.totalorder %s119, %s121
      %p128 = scmp.eq.s32.totalorder %s36, 1
      %p129 = por %p127, %p128
      %p130 = scmp.ne.s32.totalorder %s121, %s122
      %p131 = scmp.eq.s32.totalorder %s36, 0
      %p132 = por %p130, %p131
      %p133 = scmp.ne.s32.totalorder %s121, %s122
      %p134 = scmp.eq.s32.totalorder %s37, 1
      %p135 = por %p133, %p134
      %p137 = scmp.ne.s32.totalorder %s122, %s136
      %p138 = scmp.eq.s32.totalorder %s37, 0
      %p139 = por %p137, %p138
      %s141 = sadd.s32 %s140, 1
      %p144 = scmp.eq.s32.totalorder %s31, 1
      %p145 = scmp.ne.s32.totalorder %s140, %s142
      %p146 = scmp.eq.s32.totalorder %s31, 0
      %p147 = por %p145, %p146
      %p148 = scmp.ne.s32.totalorder %s140, %s142
      %p149 = scmp.eq.s32.totalorder %s36, 1
      %p150 = por %p148, %p149
      %p151 = scmp.ne.s32.totalorder %s142, %s143
      %p152 = scmp.eq.s32.totalorder %s36, 0
      %p153 = por %p151, %p152
      %p154 = scmp.ne.s32.totalorder %s142, %s143
      %p155 = scmp.eq.s32.totalorder %s37, 1
      %p156 = por %p154, %p155
      %p158 = scmp.ne.s32.totalorder %s143, %s157
      %p159 = scmp.eq.s32.totalorder %s37, 0
      %p160 = por %p158, %p159
      %s162 = sadd.s32 %s161, 1
      %p165 = scmp.eq.s32.totalorder %s31, 1
      %p166 = scmp.ne.s32.totalorder %s161, %s163
      %p167 = scmp.eq.s32.totalorder %s31, 0
      %p168 = por %p166, %p167
      %p169 = scmp.ne.s32.totalorder %s161, %s163
      %p170 = scmp.eq.s32.totalorder %s36, 1
      %p171 = por %p169, %p170
      %p172 = scmp.ne.s32.totalorder %s163, %s164
      %p173 = scmp.eq.s32.totalorder %s36, 0
      %p174 = por %p172, %p173
      %p175 = scmp.ne.s32.totalorder %s163, %s164
      %p176 = scmp.eq.s32.totalorder %s37, 1
      %p177 = por %p175, %p176
      %p179 = scmp.ne.s32.totalorder %s164, %s178
      %p180 = scmp.eq.s32.totalorder %s37, 0
      %p181 = por %p179, %p180
      %s183 = sadd.s32 %s182, 1
      %p186 = scmp.eq.s32.totalorder %s31, 1
      %p187 = scmp.ne.s32.totalorder %s182, %s184
      %p188 = scmp.eq.s32.totalorder %s31, 0
      %p189 = por %p187, %p188
      %p190 = scmp.ne.s32.totalorder %s182, %s184
      %p191 = scmp.eq.s32.totalorder %s36, 1
      %p192 = por %p190, %p191
      %p193 = scmp.ne.s32.totalorder %s184, %s185
      %p194 = scmp.eq.s32.totalorder %s36, 0
      %p195 = por %p193, %p194
      %p196 = scmp.ne.s32.totalorder %s184, %s185
      %p197 = scmp.eq.s32.totalorder %s37, 1
      %p198 = por %p196, %p197
      %p200 = scmp.ne.s32.totalorder %s185, %s199
      %p201 = scmp.eq.s32.totalorder %s37, 0
      %p202 = por %p200, %p201
      %s204 = sadd.s32 %s203, 1
      %p207 = scmp.eq.s32.totalorder %s31, 1
      %p208 = scmp.ne.s32.totalorder %s203, %s205
      %p209 = scmp.eq.s32.totalorder %s31, 0
      %p210 = por %p208, %p209
      %p211 = scmp.ne.s32.totalorder %s203, %s205
      %p212 = scmp.eq.s32.totalorder %s36, 1
      %p213 = por %p211, %p212
      %p214 = scmp.ne.s32.totalorder %s205, %s206
      %p215 = scmp.eq.s32.totalorder %s36, 0
      %p216 = por %p214, %p215
      %p217 = scmp.ne.s32.totalorder %s205, %s206
      %p218 = scmp.eq.s32.totalorder %s37, 1
      %p219 = por %p217, %p218
      %p221 = scmp.ne.s32.totalorder %s206, %s220
      %p222 = scmp.eq.s32.totalorder %s37, 0
      %p223 = por %p221, %p222
      %s225 = sadd.s32 %s224, 1
      %p228 = scmp.eq.s32.totalorder %s31, 1
      %p229 = scmp.ne.s32.totalorder %s224, %s226
      %p230 = scmp.eq.s32.totalorder %s31, 0
      %p231 = por %p229, %p230
      %p232 = scmp.ne.s32.totalorder %s224, %s226
      %p233 = scmp.eq.s32.totalorder %s36, 1
      %p234 = por %p232, %p233
      %p235 = scmp.ne.s32.totalorder %s226, %s227
      %p236 = scmp.eq.s32.totalorder %s36, 0
      %p237 = por %p235, %p236
      %p238 = scmp.ne.s32.totalorder %s226, %s227
      %p239 = scmp.eq.s32.totalorder %s37, 1
      %p240 = por %p238, %p239
      %p242 = scmp.ne.s32.totalorder %s227, %s241
      %p243 = scmp.eq.s32.totalorder %s37, 0
      %p244 = por %p242, %p243
      %s246 = sadd.s32 %s245, 1
      %p249 = scmp.eq.s32.totalorder %s31, 1
      %p250 = scmp.ne.s32.totalorder %s245, %s247
      %p251 = scmp.eq.s32.totalorder %s31, 0
      %p252 = por %p250, %p251
      %p253 = scmp.ne.s32.totalorder %s245, %s247
      %p254 = scmp.eq.s32.totalorder %s36, 1
      %p255 = por %p253, %p254
      %p256 = scmp.ne.s32.totalorder %s247, %s248
      %p257 = scmp.eq.s32.totalorder %s36, 0
      %p258 = por %p256, %p257
      %p259 = scmp.ne.s32.totalorder %s247, %s248
      %p260 = scmp.eq.s32.totalorder %s37, 1
      %p261 = por %p259, %p260
      %p263 = scmp.ne.s32.totalorder %s248, %s262
      %p264 = scmp.eq.s32.totalorder %s37, 0
      %p265 = por %p263, %p264
      %s267 = sadd.s32 %s266, 1
      %p270 = scmp.eq.s32.totalorder %s31, 1
      %p271 = scmp.ne.s32.totalorder %s266, %s268
      %p272 = scmp.eq.s32.totalorder %s31, 0
      %p273 = por %p271, %p272
      %p274 = scmp.ne.s32.totalorder %s266, %s268
      %p275 = scmp.eq.s32.totalorder %s36, 1
      %p276 = por %p274, %p275
      %p277 = scmp.ne.s32.totalorder %s268, %s269
      %p278 = scmp.eq.s32.totalorder %s36, 0
      %p279 = por %p277, %p278
      %p280 = scmp.ne.s32.totalorder %s268, %s269
      %p281 = scmp.eq.s32.totalorder %s37, 1
      %p282 = por %p280, %p281
      %p284 = scmp.ne.s32.totalorder %s269, %s283
      %p285 = scmp.eq.s32.totalorder %s37, 0
      %p286 = por %p284, %p285
      %s288 = sadd.s32 %s287, 1
      %p291 = scmp.eq.s32.totalorder %s31, 1
      %p292 = scmp.ne.s32.totalorder %s287, %s289
      %p293 = scmp.eq.s32.totalorder %s31, 0
      %p294 = por %p292, %p293
      %p295 = scmp.ne.s32.totalorder %s287, %s289
      %p296 = scmp.eq.s32.totalorder %s36, 1
      %p297 = por %p295, %p296
      %p298 = scmp.ne.s32.totalorder %s289, %s290
      %p299 = scmp.eq.s32.totalorder %s36, 0
      %p300 = por %p298, %p299
      %p301 = scmp.ne.s32.totalorder %s289, %s290
      %p302 = scmp.eq.s32.totalorder %s37, 1
      %p303 = por %p301, %p302
      %p305 = scmp.ne.s32.totalorder %s290, %s304
      %p306 = scmp.eq.s32.totalorder %s37, 0
      %p307 = por %p305, %p306
      %s309 = sadd.s32 %s308, 1
      %p312 = scmp.eq.s32.totalorder %s31, 1
      %p313 = scmp.ne.s32.totalorder %s308, %s310
      %p314 = scmp.eq.s32.totalorder %s31, 0
      %p315 = por %p313, %p314
      %p316 = scmp.ne.s32.totalorder %s308, %s310
      %p317 = scmp.eq.s32.totalorder %s36, 1
      %p318 = por %p316, %p317
      %p319 = scmp.ne.s32.totalorder %s310, %s311
      %p320 = scmp.eq.s32.totalorder %s36, 0
      %p321 = por %p319, %p320
      %p322 = scmp.ne.s32.totalorder %s310, %s311
      %p323 = scmp.eq.s32.totalorder %s37, 1
      %p324 = por %p322, %p323
      %p326 = scmp.ne.s32.totalorder %s311, %s325
      %p327 = scmp.eq.s32.totalorder %s37, 0
      %p328 = por %p326, %p327
      %s330 = sadd.s32 %s329, 1
      %p333 = scmp.eq.s32.totalorder %s31, 1
      %p334 = scmp.ne.s32.totalorder %s329, %s331
      %p335 = scmp.eq.s32.totalorder %s31, 0
      %p336 = por %p334, %p335
      %p337 = scmp.ne.s32.totalorder %s329, %s331
      %p338 = scmp.eq.s32.totalorder %s36, 1
      %p339 = por %p337, %p338
      %p340 = scmp.ne.s32.totalorder %s331, %s332
      %p341 = scmp.eq.s32.totalorder %s36, 0
      %p342 = por %p340, %p341
      %p343 = scmp.ne.s32.totalorder %s331, %s332
      %p344 = scmp.eq.s32.totalorder %s37, 1
      %p345 = por %p343, %p344
      %p347 = scmp.ne.s32.totalorder %s332, %s346
      %p348 = scmp.eq.s32.totalorder %s37, 0
      %p349 = por %p347, %p348
      %s351 = sadd.s32 %s350, 1
      %p354 = scmp.eq.s32.totalorder %s31, 1
      %p355 = scmp.ne.s32.totalorder %s350, %s352
      %p356 = scmp.eq.s32.totalorder %s31, 0
      %p357 = por %p355, %p356
      %p358 = scmp.ne.s32.totalorder %s350, %s352
      %p359 = scmp.eq.s32.totalorder %s36, 1
      %p360 = por %p358, %p359
      %p361 = scmp.ne.s32.totalorder %s352, %s353
      %p362 = scmp.eq.s32.totalorder %s36, 0
      %p363 = por %p361, %p362
      %p364 = scmp.ne.s32.totalorder %s352, %s353
      %p365 = scmp.eq.s32.totalorder %s37, 1
      %p366 = por %p364, %p365
      %p368 = scmp.ne.s32.totalorder %s353, %s367
      %p369 = scmp.eq.s32.totalorder %s37, 0
      %p370 = por %p368, %p369
      %s372 = sadd.s32 %s371, 1
      %p375 = scmp.eq.s32.totalorder %s31, 1
      %p376 = scmp.ne.s32.totalorder %s371, %s373
      %p377 = scmp.eq.s32.totalorder %s31, 0
      %p378 = por %p376, %p377
      %p379 = scmp.ne.s32.totalorder %s371, %s373
      %p380 = scmp.eq.s32.totalorder %s36, 1
      %p381 = por %p379, %p380
      %p382 = scmp.ne.s32.totalorder %s373, %s374
      %p383 = scmp.eq.s32.totalorder %s36, 0
      %p384 = por %p382, %p383
      %p385 = scmp.ne.s32.totalorder %s373, %s374
      %p386 = scmp.eq.s32.totalorder %s37, 1
      %p387 = por %p385, %p386
      %p389 = scmp.ne.s32.totalorder %s374, %s388
      %p390 = scmp.eq.s32.totalorder %s37, 0
      %p391 = por %p389, %p390
      %s393 = sadd.s32 %s392, 1
      %p396 = scmp.eq.s32.totalorder %s31, 1
      %p397 = scmp.ne.s32.totalorder %s392, %s394
      %p398 = scmp.eq.s32.totalorder %s31, 0
      %p399 = por %p397, %p398
      %p400 = scmp.ne.s32.totalorder %s392, %s394
      %p401 = scmp.eq.s32.totalorder %s36, 1
      %p402 = por %p400, %p401
      %p403 = scmp.ne.s32.totalorder %s394, %s395
      %p404 = scmp.eq.s32.totalorder %s36, 0
      %p405 = por %p403, %p404
      %p406 = scmp.ne.s32.totalorder %s394, %s395
      %p407 = scmp.eq.s32.totalorder %s37, 1
      %p408 = por %p406, %p407
      %p410 = scmp.ne.s32.totalorder %s395, %s409
      %p411 = scmp.eq.s32.totalorder %s37, 0
      %p412 = por %p410, %p411
      %s413 = ssub.s32 %s38, %s50
      %s414 = ssub.s32 %s39, %s46
      %s415 = sor.u32 %s413, %s414
      %p416 = scmp.eq.s32.totalorder %s415, 0
      %s418 = sadd.s32 %s417, 1
      %s419 = scalar_select %p416, %s417, %s418
      %p422 = pneg %p416
      %p423 = scmp.eq.s32.totalorder %s31, 1
      %p424 = por %p422, %p423
      %p425 = scmp.ne.s32.totalorder %s417, %s420
      %p426 = scmp.eq.s32.totalorder %s31, 0
      %p427 = por %p425, %p426
      %p428 = scmp.ne.s32.totalorder %s417, %s420
      %p429 = scmp.eq.s32.totalorder %s36, 1
      %p430 = por %p428, %p429
      %p431 = scmp.ne.s32.totalorder %s420, %s421
      %p432 = scmp.eq.s32.totalorder %s36, 0
      %p433 = por %p431, %p432
      %p434 = scmp.ne.s32.totalorder %s420, %s421
      %p435 = scmp.eq.s32.totalorder %s37, 1
      %p436 = por %p434, %p435
      %p438 = scmp.ne.s32.totalorder %s421, %s437
      %p439 = scmp.eq.s32.totalorder %s37, 0
      %p440 = por %p438, %p439
      %p441 = scmp.le.s32.totalorder 1, %s31
      %p442 = scmp.lt.s32.totalorder %s31, 3
      %p443 = pnand %p441, %p442
      %p444 = pneg %p443
      // Predicated region
      $region9: #{tpu_custom_call.1} parent=5 // pred_check
        _
      $region10: #{tpu_custom_call.1} parent=5 // pred_check_branch
        %446 = sbr.rel (%p443) target = $region12
      $region11: #{tpu_custom_call.1} parent=5 // pred_region
        %s447 = ssub.s32 %s31, 1
        // Predicated region
        $region13: #{tpu_custom_call.1} parent=11 // pred_check
          %p448 = pneg %p90
        $region14: #{tpu_custom_call.1} parent=11 // pred_check_branch
          %450 = sbr.rel (%p448) target = $region16
        $region15: #{tpu_custom_call.1} parent=11 // pred_region
          _
        $region16: #{tpu_custom_call.1} parent=11 // pred_fallthru
          _
        // Predicated region
        $region17: #{tpu_custom_call.1} parent=11 // pred_check
          %p451 = pneg %p111
        $region18: #{tpu_custom_call.1} parent=11 // pred_check_branch
          %453 = sbr.rel (%p451) target = $region20
        $region19: #{tpu_custom_call.1} parent=11 // pred_region
          %s455 = ssub.s32 16, 16
          %456 = vsyncadd [#allocation7], %s455
          %s458 = sshll.u32 [#allocation6], 4
          %s459 = int_to_ptr.vmem [resolvable:$true] %s458
          %461 = dma.hbm_to_vmem [thread:$0]  %s2, 16, %s459, [#allocation7]
        $region20: #{tpu_custom_call.1} parent=11 // pred_fallthru
          _
        // Predicated region
        $region21: #{tpu_custom_call.1} parent=11 // pred_check
          %p462 = pneg %p132
        $region22: #{tpu_custom_call.1} parent=11 // pred_check_branch
          %464 = sbr.rel (%p462) target = $region24
        $region23: #{tpu_custom_call.1} parent=11 // pred_region
          _
        $region24: #{tpu_custom_call.1} parent=11 // pred_fallthru
          _
        // Predicated region
        $region25: #{tpu_custom_call.1} parent=11 // pred_check
          %p465 = pneg %p153
        $region26: #{tpu_custom_call.1} parent=11 // pred_check_branch
          %467 = sbr.rel (%p465) target = $region28
        $region27: #{tpu_custom_call.1} parent=11 // pred_region
          %s469 = ssub.s32 16, 16
          %470 = vsyncadd [#allocation10], %s469
          %s472 = sshll.u32 [#allocation9], 4
          %s473 = int_to_ptr.vmem [resolvable:$true] %s472
          %475 = dma.hbm_to_vmem [thread:$0]  %s4, 16, %s473, [#allocation10]
        $region28: #{tpu_custom_call.1} parent=11 // pred_fallthru
          _
        // Predicated region
        $region29: #{tpu_custom_call.1} parent=11 // pred_check
          %p476 = pneg %p174
        $region30: #{tpu_custom_call.1} parent=11 // pred_check_branch
          %478 = sbr.rel (%p476) target = $region32
        $region31: #{tpu_custom_call.1} parent=11 // pred_region
          _
        $region32: #{tpu_custom_call.1} parent=11 // pred_fallthru
          _
        // Predicated region
        $region33: #{tpu_custom_call.1} parent=11 // pred_check
          %p479 = pneg %p195
        $region34: #{tpu_custom_call.1} parent=11 // pred_check_branch
          %481 = sbr.rel (%p479) target = $region36
        $region35: #{tpu_custom_call.1} parent=11 // pred_region
          %s483 = ssub.s32 16, 16
          %484 = vsyncadd [#allocation10], %s483
          %s486 = sshll.u32 [#allocation11], 4
          %s487 = int_to_ptr.vmem [resolvable:$true] %s486
          %489 = dma.hbm_to_vmem [thread:$0]  %s6, 16, %s487, [#allocation10]
        $region36: #{tpu_custom_call.1} parent=11 // pred_fallthru
          _
        // Predicated region
        $region37: #{tpu_custom_call.1} parent=11 // pred_check
          %p490 = pneg %p216
        $region38: #{tpu_custom_call.1} parent=11 // pred_check_branch
          %492 = sbr.rel (%p490) target = $region40
        $region39: #{tpu_custom_call.1} parent=11 // pred_region
          %s494 = ssub.s32 256, 256
          %495 = vsyncadd [#allocation13], %s494
          %s496 = sshll.u32 [#allocation12], 4
          %s497 = int_to_ptr.vmem [resolvable:$true] %s496
          %502 = dma.hbm_to_vmem [thread:$0]  %s7, 256, %s497, [#allocation13], 64, 64, 4
        $region40: #{tpu_custom_call.1} parent=11 // pred_fallthru
          _
        // Predicated region
        $region41: #{tpu_custom_call.1} parent=11 // pred_check
          %p503 = pneg %p237
        $region42: #{tpu_custom_call.1} parent=11 // pred_check_branch
          %505 = sbr.rel (%p503) target = $region44
        $region43: #{tpu_custom_call.1} parent=11 // pred_region
          %s507 = ssub.s32 16, 16
          %508 = vsyncadd [#allocation13], %s507
          %s510 = sshll.u32 [#allocation14], 4
          %s511 = int_to_ptr.vmem [resolvable:$true] %s510
          %513 = dma.hbm_to_vmem [thread:$0]  %s8, 16, %s511, [#allocation13]
        $region44: #{tpu_custom_call.1} parent=11 // pred_fallthru
          _
        // Predicated region
        $region45: #{tpu_custom_call.1} parent=11 // pred_check
          %p514 = pneg %p258
        $region46: #{tpu_custom_call.1} parent=11 // pred_check_branch
          %516 = sbr.rel (%p514) target = $region48
        $region47: #{tpu_custom_call.1} parent=11 // pred_region
          _
        $region48: #{tpu_custom_call.1} parent=11 // pred_fallthru
          _
        // Predicated region
        $region49: #{tpu_custom_call.1} parent=11 // pred_check
          %p517 = pneg %p279
        $region50: #{tpu_custom_call.1} parent=11 // pred_check_branch
          %519 = sbr.rel (%p517) target = $region52
        $region51: #{tpu_custom_call.1} parent=11 // pred_region
          %s521 = ssub.s32 16, 16
          %522 = vsyncadd [#allocation16], %s521
          %s524 = sshll.u32 [#allocation15], 4
          %s525 = int_to_ptr.vmem [resolvable:$true] %s524
          %527 = dma.hbm_to_vmem [thread:$0]  %s10, 16, %s525, [#allocation16]
        $region52: #{tpu_custom_call.1} parent=11 // pred_fallthru
          _
        // Predicated region
        $region53: #{tpu_custom_call.1} parent=11 // pred_check
          %p528 = pneg %p300
        $region54: #{tpu_custom_call.1} parent=11 // pred_check_branch
          %530 = sbr.rel (%p528) target = $region56
        $region55: #{tpu_custom_call.1} parent=11 // pred_region
          %s532 = ssub.s32 16, 16
          %533 = vsyncadd [#allocation16], %s532
          %s535 = sshll.u32 [#allocation17], 4
          %s536 = int_to_ptr.vmem [resolvable:$true] %s535
          %538 = dma.hbm_to_vmem [thread:$0]  %s11, 16, %s536, [#allocation16]
        $region56: #{tpu_custom_call.1} parent=11 // pred_fallthru
          _
        // Predicated region
        $region57: #{tpu_custom_call.1} parent=11 // pred_check
          %p539 = pneg %p321
        $region58: #{tpu_custom_call.1} parent=11 // pred_check_branch
          %541 = sbr.rel (%p539) target = $region60
        $region59: #{tpu_custom_call.1} parent=11 // pred_region
          %s543 = ssub.s32 16, 16
          %544 = vsyncadd [#allocation19], %s543
          %s546 = sshll.u32 [#allocation18], 4
          %s547 = int_to_ptr.vmem [resolvable:$true] %s546
          %549 = dma.hbm_to_vmem [thread:$0]  %s12, 16, %s547, [#allocation19]
        $region60: #{tpu_custom_call.1} parent=11 // pred_fallthru
          _
        // Predicated region
        $region61: #{tpu_custom_call.1} parent=11 // pred_check
          %p550 = pneg %p342
        $region62: #{tpu_custom_call.1} parent=11 // pred_check_branch
          %552 = sbr.rel (%p550) target = $region64
        $region63: #{tpu_custom_call.1} parent=11 // pred_region
          _
        $region64: #{tpu_custom_call.1} parent=11 // pred_fallthru
          _
        // Predicated region
        $region65: #{tpu_custom_call.1} parent=11 // pred_check
          %p553 = pneg %p363
        $region66: #{tpu_custom_call.1} parent=11 // pred_check_branch
          %555 = sbr.rel (%p553) target = $region68
        $region67: #{tpu_custom_call.1} parent=11 // pred_region
          _
        $region68: #{tpu_custom_call.1} parent=11 // pred_fallthru
          _
        // Predicated region
        $region69: #{tpu_custom_call.1} parent=11 // pred_check
          %p556 = pneg %p384
        $region70: #{tpu_custom_call.1} parent=11 // pred_check_branch
          %558 = sbr.rel (%p556) target = $region72
        $region71: #{tpu_custom_call.1} parent=11 // pred_region
          _
        $region72: #{tpu_custom_call.1} parent=11 // pred_fallthru
          _
        // Predicated region
        $region73: #{tpu_custom_call.1} parent=11 // pred_check
          %p559 = pneg %p405
        $region74: #{tpu_custom_call.1} parent=11 // pred_check_branch
          %561 = sbr.rel (%p559) target = $region76
        $region75: #{tpu_custom_call.1} parent=11 // pred_region
          _
        $region76: #{tpu_custom_call.1} parent=11 // pred_fallthru
          _
      $region12: #{tpu_custom_call.1} parent=5 // pred_fallthru
        _
      %p562 = scmp.lt.s32.totalorder %s31, 2
      // Predicated region
      $region77: #{tpu_custom_call.1} parent=5 // pred_check
        %p563 = pneg %p562
      $region78: #{tpu_custom_call.1} parent=5 // pred_check_branch
        %565 = sbr.rel (%p563) target = $region80
      $region79: #{tpu_custom_call.1} parent=5 // pred_region
        // Predicated region
        $region81: #{tpu_custom_call.1} parent=79 // pred_check
          %p566 = pneg %p63
        $region82: #{tpu_custom_call.1} parent=79 // pred_check_branch
          %568 = sbr.rel (%p566) target = $region84
        $region83: #{tpu_custom_call.1} parent=79 // pred_region
          %p569 = scmp.lt.s32.totalorder %s38, 1
          %s570 = scalar_select %p569, %s38, 1
          %s571 = smul.addr %s570, 8
          %s572 = scalar_lea.vmem %s0, %s571
        $region84: #{tpu_custom_call.1} parent=79 // pred_fallthru
          _
      $region80: #{tpu_custom_call.1} parent=5 // pred_fallthru
        _
      %p573 = scmp.le.s32.totalorder 1, %s31
      %p574 = scmp.lt.s32.totalorder %s31, 3
      %p575 = pnand %p573, %p574
      %p576 = pneg %p575
      // Predicated region
      $region85: #{tpu_custom_call.1} parent=5 // pred_check
        _
      $region86: #{tpu_custom_call.1} parent=5 // pred_check_branch
        %578 = sbr.rel (%p575) target = $region88
      $region87: #{tpu_custom_call.1} parent=5 // pred_region
        %s579 = ssub.s32 %s31, 1
        // Predicated region
        $region89: #{tpu_custom_call.1} parent=87 // pred_check
          %p580 = pneg %p111
        $region90: #{tpu_custom_call.1} parent=87 // pred_check_branch
          %582 = sbr.rel (%p580) target = $region92
        $region91: #{tpu_custom_call.1} parent=87 // pred_region
          %583 = dma.done [#allocation7], 16
        $region92: #{tpu_custom_call.1} parent=87 // pred_fallthru
          _
        // Predicated region
        $region93: #{tpu_custom_call.1} parent=87 // pred_check
          %p584 = pneg %p153
        $region94: #{tpu_custom_call.1} parent=87 // pred_check_branch
          %586 = sbr.rel (%p584) target = $region96
        $region95: #{tpu_custom_call.1} parent=87 // pred_region
          %587 = dma.done [#allocation10], 16
        $region96: #{tpu_custom_call.1} parent=87 // pred_fallthru
          _
        // Predicated region
        $region97: #{tpu_custom_call.1} parent=87 // pred_check
          %p588 = pneg %p195
        $region98: #{tpu_custom_call.1} parent=87 // pred_check_branch
          %590 = sbr.rel (%p588) target = $region100
        $region99: #{tpu_custom_call.1} parent=87 // pred_region
          %591 = dma.done [#allocation10], 16
        $region100: #{tpu_custom_call.1} parent=87 // pred_fallthru
          _
        // Predicated region
        $region101: #{tpu_custom_call.1} parent=87 // pred_check
          %p592 = pneg %p216
        $region102: #{tpu_custom_call.1} parent=87 // pred_check_branch
          %594 = sbr.rel (%p592) target = $region104
        $region103: #{tpu_custom_call.1} parent=87 // pred_region
          %595 = dma.done [#allocation13], 256
        $region104: #{tpu_custom_call.1} parent=87 // pred_fallthru
          _
        // Predicated region
        $region105: #{tpu_custom_call.1} parent=87 // pred_check
          %p596 = pneg %p237
        $region106: #{tpu_custom_call.1} parent=87 // pred_check_branch
          %598 = sbr.rel (%p596) target = $region108
        $region107: #{tpu_custom_call.1} parent=87 // pred_region
          %599 = dma.done [#allocation13], 16
        $region108: #{tpu_custom_call.1} parent=87 // pred_fallthru
          _
        // Predicated region
        $region109: #{tpu_custom_call.1} parent=87 // pred_check
          %p600 = pneg %p279
        $region110: #{tpu_custom_call.1} parent=87 // pred_check_branch
          %602 = sbr.rel (%p600) target = $region112
        $region111: #{tpu_custom_call.1} parent=87 // pred_region
          %603 = dma.done [#allocation16], 16
        $region112: #{tpu_custom_call.1} parent=87 // pred_fallthru
          _
        // Predicated region
        $region113: #{tpu_custom_call.1} parent=87 // pred_check
          %p604 = pneg %p300
        $region114: #{tpu_custom_call.1} parent=87 // pred_check_branch
          %606 = sbr.rel (%p604) target = $region116
        $region115: #{tpu_custom_call.1} parent=87 // pred_region
          %607 = dma.done [#allocation16], 16
        $region116: #{tpu_custom_call.1} parent=87 // pred_fallthru
          _
        // Predicated region
        $region117: #{tpu_custom_call.1} parent=87 // pred_check
          %p608 = pneg %p321
        $region118: #{tpu_custom_call.1} parent=87 // pred_check_branch
          %610 = sbr.rel (%p608) target = $region120
        $region119: #{tpu_custom_call.1} parent=87 // pred_region
          %611 = dma.done [#allocation19], 16
        $region120: #{tpu_custom_call.1} parent=87 // pred_fallthru
          _
        %p612 = scmp.lt.s32.totalorder %s40, 1
        %s613 = scalar_select %p612, %s40, 1
        %s614 = smul.addr %s613, 8
        %s615 = scalar_lea.vmem %s0, %s614
        %p616 = pneg %p69
        %p617 = pneg %p66
        %p618 = pneg %p90
        %p619 = pneg %p87
        %p620 = pneg %p111
        %p621 = pneg %p108
        %p622 = pneg %p132
        %p623 = pneg %p129
        %p624 = pneg %p153
        %p625 = pneg %p150
        %p626 = pneg %p174
        %p627 = pneg %p171
        %p628 = pneg %p195
        %p629 = pneg %p192
        %p630 = pneg %p216
        %p631 = pneg %p213
        %p632 = pneg %p237
        %p633 = pneg %p234
        %p634 = pneg %p258
        %p635 = pneg %p255
        %p636 = pneg %p279
        %p637 = pneg %p276
        %p638 = pneg %p300
        %p639 = pneg %p297
        %p640 = pneg %p321
        %p641 = pneg %p318
        %p642 = pneg %p342
        %p643 = pneg %p339
        %p644 = pneg %p363
        %p645 = pneg %p360
        %p646 = pneg %p384
        %p647 = pneg %p381
        %p648 = pneg %p405
        %p649 = pneg %p402
        %p650 = pneg %p433
        %p651 = pneg %p430
        %s652 = sand.u32 %s420, 1
        %s653 = scalar_lea.sflag [#allocation8], %s652
        %s654 = sand.u32 %s420, 1
        %s655 = smul.addr %s654, 8
        %s656 = scalar_lea.vmem [#allocation20], %s655
        %p657 = scmp.lt.s32.totalorder %s40, 1
        %s658 = scalar_select %p657, %s40, 1
        %s659 = smul.addr %s658, 8
        %s660 = scalar_lea.vmem %s0, %s659
        %p662 = scmp.eq.s32.totalorder %s41, 0
        // Predicated region
        $region121: #{tpu_custom_call.1} parent=87 // pred_check
          %p663 = pneg %p662
        $region122: #{tpu_custom_call.1} parent=87 // pred_check_branch
          %665 = sbr.rel (%p663) target = $region124
        $region123: #{tpu_custom_call.1} parent=87 // pred_region
          %v666 = vld [vmem:[%s660] sm:$0xff]
          %v667 = vld [vmem:[%s1] sm:$0x1]
          %v668 = vld [vmem:[#allocation6] sm:$0x1]
          %vm669 = vcmask 261120
          %v670 = vsel %vm669, %v666, 0.0
          %671 = vadd.xlane.f32.xlu0 %v670
          %v672 = vpop.xlane.xlu0 %671
          %v673 = vrcp.pop 32.0
          %v674 = vmul.f32 %v672, %v673
          %v675 = vsub.f32 %v666, %v674
          %v676 = vmul.f32 %v675, %v675
          %v677 = vsel %vm669, %v676, 0.0
          %678 = vadd.xlane.f32.xlu0 %v677
          %v679 = vpop.xlane.xlu0 %678
          %v680 = vmul.f32 %v679, %v673
          %v681 = vadd.f32 %v680, 1e-05
          %v682 = vrsqrt.pop %v681
          %v683 = vmul.f32 %v675, %v682
          %v685 = vlaneseq
          %v686 = vshrl.u32 %v685, 7
          %v687 = vsub.s32 0, %v686
          %v688 = vrot.slane %v667, %v687
          %v690 = vmul.f32 %v683, %v688
          %v692 = vlaneseq
          %v693 = vshrl.u32 %v692, 7
          %v694 = vsub.s32 0, %v693
          %v695 = vrot.slane %v668, %v694
          %v697 = vadd.f32 %v690, %v695
          %v698 = vpack.c.bf16 %v697, %v697
          %v699 = vld [vmem:[%s3] sm:$0xf]
          %v700 = vld [vmem:[%s3 + $0x4] sm:$0xf]
          %v701 = vld [vmem:[%s3 + $0x8] sm:$0xf]
          %v702 = vld [vmem:[%s3 + $0xc] sm:$0xf]
          %v703 = vld [vmem:[#allocation9] sm:$0x1]
          %v705 = vlaneseq
          %v706 = vshrl.u32 %v705, 7
          %v707 = vsub.s32 0, %v706
          %v708 = vrot.slane %v703, %v707
          %v714 = vunpack.c.l.b16 %v699
          %v715 = vunpack.c.l.b16 %v700
          %v716 = vunpack.c.l.b16 %v701
          %v717 = vunpack.c.l.b16 %v702
          %v718 = vpack.c.b16 %v715, %v714
          %v719 = vpack.c.b16 %v717, %v716
          %v723 = vsel %vm669, %v698, 0
          %725 = vmatprep.subr.bf16.mxu0 0
          %726 = vmatpush1.bf16.msra.mxu0 %v718
          %727 = vmatprep.subr.bf16.mxu0 0
          %728 = vmatpush1.bf16.msra.mxu0 %v719
          %729 = vmatprep.subr.bf16.mxu0 0
          %730 = vmatpush1.bf16.msra.mxu0 0
          %731 = vmatprep.subr.bf16.mxu0 0
          %732 = vmatpush1.bf16.msra.mxu0 0
          %733 = vmatprep.subr.bf16.mxu0 0
          %734 = vmatpush1.bf16.msra.mxu0 0
          %735 = vmatprep.subr.bf16.mxu0 0
          %736 = vmatpush1.bf16.msra.mxu0 0
          %737 = vmatprep.subr.bf16.mxu0 0
          %738 = vmatpush1.bf16.msra.mxu0 0
          %739 = vmatprep.subr.bf16.mxu0 0
          %740 = vmatpush1.bf16.msra.mxu0 0
          %741 = vmatprep.subr.bf16.mxu0 0
          %742 = vmatpush1.bf16.msra.mxu0 0
          %743 = vmatprep.subr.bf16.mxu0 0
          %744 = vmatpush1.bf16.msra.mxu0 0
          %745 = vmatprep.subr.bf16.mxu0 0
          %746 = vmatpush1.bf16.msra.mxu0 0
          %747 = vmatprep.subr.bf16.mxu0 0
          %748 = vmatpush1.bf16.msra.mxu0 0
          %749 = vmatprep.subr.bf16.mxu0 0
          %750 = vmatpush1.bf16.msra.mxu0 0
          %751 = vmatprep.subr.bf16.mxu0 0
          %752 = vmatpush1.bf16.msra.mxu0 0
          %753 = vmatprep.subr.bf16.mxu0 0
          %754 = vmatpush1.bf16.msra.mxu0 0
          %755 = vmatprep.subr.bf16.mxu0 0
          %756 = vmatpush1.bf16.msra.mxu0 0
          %757 = vmatprep.mubr.bf16.mxu0 0
          %758 = vmatmul.mubr.bf16.gmra.mrb[0].mxu0 %v723
          %v759 = vpop.f32.mrb[0].mxu0
          %v760 = vadd.f32 %v708, %v759
          %v761 = vpop.f32.mrb[0].mxu0
          %v762 = vpop.f32.mrb[0].mxu0
          %v763 = vpop.f32.mrb[0].mxu0
          %764 = vdwg.mxu0
          %v765 = vmul.f32 %v760, 0.35355338
          %v766 = vpack.c.bf16 %v765, %v765
          %vm767 = vcmask 257024
          %768 = vst.msk [vmem:[#allocation2] sm:$0xf] %vm767, %v766
          %v769 = vld [vmem:[%s5] sm:$0xf]
          %v770 = vld [vmem:[%s5 + $0x4] sm:$0xf]
          %v771 = vld [vmem:[%s5 + $0x8] sm:$0xf]
          %v772 = vld [vmem:[%s5 + $0xc] sm:$0xf]
          %v773 = vld [vmem:[#allocation11] sm:$0x1]
          %v775 = vlaneseq
          %v776 = vshrl.u32 %v775, 7
          %v777 = vsub.s32 0, %v776
          %v778 = vrot.slane %v773, %v777
          %v784 = vunpack.c.l.b16 %v769
          %v785 = vunpack.c.l.b16 %v770
          %v786 = vunpack.c.l.b16 %v771
          %v787 = vunpack.c.l.b16 %v772
          %v788 = vpack.c.b16 %v785, %v784
          %v789 = vpack.c.b16 %v787, %v786
          %792 = vmatprep.subr.bf16.mxu0 0
          %793 = vmatpush1.bf16.msra.mxu0 %v788
          %794 = vmatprep.subr.bf16.mxu0 0
          %795 = vmatpush1.bf16.msra.mxu0 %v789
          %796 = vmatprep.subr.bf16.mxu0 0
          %797 = vmatpush1.bf16.msra.mxu0 0
          %798 = vmatprep.subr.bf16.mxu0 0
          %799 = vmatpush1.bf16.msra.mxu0 0
          %800 = vmatprep.subr.bf16.mxu0 0
          %801 = vmatpush1.bf16.msra.mxu0 0
          %802 = vmatprep.subr.bf16.mxu0 0
          %803 = vmatpush1.bf16.msra.mxu0 0
          %804 = vmatprep.subr.bf16.mxu0 0
          %805 = vmatpush1.bf16.msra.mxu0 0
          %806 = vmatprep.subr.bf16.mxu0 0
          %807 = vmatpush1.bf16.msra.mxu0 0
          %808 = vmatprep.subr.bf16.mxu0 0
          %809 = vmatpush1.bf16.msra.mxu0 0
          %810 = vmatprep.subr.bf16.mxu0 0
          %811 = vmatpush1.bf16.msra.mxu0 0
          %812 = vmatprep.subr.bf16.mxu0 0
          %813 = vmatpush1.bf16.msra.mxu0 0
          %814 = vmatprep.subr.bf16.mxu0 0
          %815 = vmatpush1.bf16.msra.mxu0 0
          %816 = vmatprep.subr.bf16.mxu0 0
          %817 = vmatpush1.bf16.msra.mxu0 0
          %818 = vmatprep.subr.bf16.mxu0 0
          %819 = vmatpush1.bf16.msra.mxu0 0
          %820 = vmatprep.subr.bf16.mxu0 0
          %821 = vmatpush1.bf16.msra.mxu0 0
          %822 = vmatprep.subr.bf16.mxu0 0
          %823 = vmatpush1.bf16.msra.mxu0 0
          %824 = vmatprep.mubr.bf16.mxu0 0
          %825 = vmatmul.mubr.bf16.gmra.mrb[0].mxu0 %v723
          %v826 = vpop.f32.mrb[0].mxu0
          %v827 = vadd.f32 %v778, %v826
          %v828 = vpop.f32.mrb[0].mxu0
          %v829 = vpop.f32.mrb[0].mxu0
          %v830 = vpop.f32.mrb[0].mxu0
          %831 = vdwg.mxu0
          %v832 = vpack.c.bf16 %v827, %v827
          %833 = vst.msk [vmem:[#allocation3] sm:$0xf] %vm767, %v832
          %v834 = vld [vmem:[#allocation12] sm:$0xf]
          %v835 = vld [vmem:[#allocation12 + $0x4] sm:$0xf]
          %v836 = vld [vmem:[#allocation12 + $0x8] sm:$0xf]
          %v837 = vld [vmem:[#allocation12 + $0xc] sm:$0xf]
          %v838 = vld [vmem:[#allocation14] sm:$0x1]
          %v840 = vlaneseq
          %v841 = vshrl.u32 %v840, 7
          %v842 = vsub.s32 0, %v841
          %v843 = vrot.slane %v838, %v842
          %v849 = vunpack.c.l.b16 %v834
          %v850 = vunpack.c.l.b16 %v835
          %v851 = vunpack.c.l.b16 %v836
          %v852 = vunpack.c.l.b16 %v837
          %v853 = vpack.c.b16 %v850, %v849
          %v854 = vpack.c.b16 %v852, %v851
          %857 = vmatprep.subr.bf16.mxu0 0
          %858 = vmatpush1.bf16.msra.mxu0 %v853
          %859 = vmatprep.subr.bf16.mxu0 0
          %860 = vmatpush1.bf16.msra.mxu0 %v854
          %861 = vmatprep.subr.bf16.mxu0 0
          %862 = vmatpush1.bf16.msra.mxu0 0
          %863 = vmatprep.subr.bf16.mxu0 0
          %864 = vmatpush1.bf16.msra.mxu0 0
          %865 = vmatprep.subr.bf16.mxu0 0
          %866 = vmatpush1.bf16.msra.mxu0 0
          %867 = vmatprep.subr.bf16.mxu0 0
          %868 = vmatpush1.bf16.msra.mxu0 0
          %869 = vmatprep.subr.bf16.mxu0 0
          %870 = vmatpush1.bf16.msra.mxu0 0
          %871 = vmatprep.subr.bf16.mxu0 0
          %872 = vmatpush1.bf16.msra.mxu0 0
          %873 = vmatprep.subr.bf16.mxu0 0
          %874 = vmatpush1.bf16.msra.mxu0 0
          %875 = vmatprep.subr.bf16.mxu0 0
          %876 = vmatpush1.bf16.msra.mxu0 0
          %877 = vmatprep.subr.bf16.mxu0 0
          %878 = vmatpush1.bf16.msra.mxu0 0
          %879 = vmatprep.subr.bf16.mxu0 0
          %880 = vmatpush1.bf16.msra.mxu0 0
          %881 = vmatprep.subr.bf16.mxu0 0
          %882 = vmatpush1.bf16.msra.mxu0 0
          %883 = vmatprep.subr.bf16.mxu0 0
          %884 = vmatpush1.bf16.msra.mxu0 0
          %885 = vmatprep.subr.bf16.mxu0 0
          %886 = vmatpush1.bf16.msra.mxu0 0
          %887 = vmatprep.subr.bf16.mxu0 0
          %888 = vmatpush1.bf16.msra.mxu0 0
          %889 = vmatprep.mubr.bf16.mxu0 0
          %890 = vmatmul.mubr.bf16.gmra.mrb[0].mxu0 %v723
          %v891 = vpop.f32.mrb[0].mxu0
          %v892 = vadd.f32 %v843, %v891
          %v893 = vpop.f32.mrb[0].mxu0
          %v894 = vpop.f32.mrb[0].mxu0
          %v895 = vpop.f32.mrb[0].mxu0
          %896 = vdwg.mxu0
          %v897 = vpack.c.bf16 %v892, %v892
          %898 = vst.msk [vmem:[#allocation4] sm:$0xf] %vm767, %v897
        $region124: #{tpu_custom_call.1} parent=87 // pred_fallthru
          _
        %s899 = smul.u32 %s41, 8
        %s900 = scalar_lea.vmem %s660, %s899
        %v901 = vld [vmem:[%s900] sm:$0xff]
        %s902 = sshra.s32 %s899, 3
        %s903 = sand.u32 %s899, 7
        %s904 = smul.addr %s902, 4
        %s905 = scalar_lea.vmem [#allocation2], %s904
        %v906 = vld [vmem:[%s905] sm:$0xf]
        %v907 = vld [vmem:[#allocation3] sm:$0xf]
        %v908 = vld [vmem:[#allocation4] sm:$0xf]
        %vm909 = vcmask 64512
        %v911 = vsel %vm909, %v906, 0
        %v914 = vsel %vm909, %v907, 0
        %916 = vmatprep.subr.bf16.mxu0 0
        %917 = vmatpush1.bf16.xpose.msra.mxu0 %v914
        %918 = vmatprep.subr.bf16.mxu0 0
        %919 = vmatpush1.bf16.xpose.msra.mxu0 0
        %920 = vmatprep.subr.bf16.mxu0 0
        %921 = vmatpush1.bf16.xpose.msra.mxu0 0
        %922 = vmatprep.subr.bf16.mxu0 0
        %923 = vmatpush1.bf16.xpose.msra.mxu0 0
        %924 = vmatprep.subr.bf16.mxu0 0
        %925 = vmatpush1.bf16.xpose.msra.mxu0 0
        %926 = vmatprep.subr.bf16.mxu0 0
        %927 = vmatpush1.bf16.xpose.msra.mxu0 0
        %928 = vmatprep.subr.bf16.mxu0 0
        %929 = vmatpush1.bf16.xpose.msra.mxu0 0
        %930 = vmatprep.subr.bf16.mxu0 0
        %931 = vmatpush1.bf16.xpose.msra.mxu0 0
        %932 = vmatprep.subr.bf16.mxu0 0
        %933 = vmatpush1.bf16.xpose.msra.mxu0 0
        %934 = vmatprep.subr.bf16.mxu0 0
        %935 = vmatpush1.bf16.xpose.msra.mxu0 0
        %936 = vmatprep.subr.bf16.mxu0 0
        %937 = vmatpush1.bf16.xpose.msra.mxu0 0
        %938 = vmatprep.subr.bf16.mxu0 0
        %939 = vmatpush1.bf16.xpose.msra.mxu0 0
        %940 = vmatprep.subr.bf16.mxu0 0
        %941 = vmatpush1.bf16.xpose.msra.mxu0 0
        %942 = vmatprep.subr.bf16.mxu0 0
        %943 = vmatpush1.bf16.xpose.msra.mxu0 0
        %944 = vmatprep.subr.bf16.mxu0 0
        %945 = vmatpush1.bf16.xpose.msra.mxu0 0
        %946 = vmatprep.subr.bf16.mxu0 0
        %947 = vmatpush1.bf16.xpose.msra.mxu0 0
        %948 = vmatprep.mubr.bf16.mxu0 0
        %949 = vmatmul.mubr.bf16.gmra.mrb[0].mxu0 %v911
        %v950 = vpop.f32.mrb[0].mxu0
        %v951 = vadd.f32 0.0, %v950
        %v952 = vpop.f32.mrb[0].mxu0
        %v953 = vpop.f32.mrb[0].mxu0
        %v954 = vpop.f32.mrb[0].mxu0
        %955 = vdwg.mxu0
        %v956 = vsel %vm909, %v951, -inf
        %957 = vmax.xlane.f32.xlu0 %v956
        %v958 = vpop.xlane.xlu0 %957
        %v959 = vsub.f32 %v951, %v958
        %v960 = vmul.f32 %v959, 1.442695
        %v961 = vpow.pop %v960
        %v962 = vsel %vm909, %v961, 0.0
        %963 = vadd.xlane.f32.xlu0 %v962
        %v964 = vpop.xlane.xlu0 %963
        %v965 = vrcp.pop %v964
        %v966 = vmul.f32 %v961, %v965
        %v967 = vpack.c.bf16 %v966, %v966
        %v969 = vsel %vm909, %v967, 0
        %vm971 = vcmask 1043456
        %v973 = vsel %vm971, %v908, 0
        %975 = vmatprep.subr.bf16.mxu0 0
        %976 = vmatpush1.bf16.msra.mxu0 %v973
        %977 = vmatprep.subr.bf16.mxu0 0
        %978 = vmatpush1.bf16.msra.mxu0 0
        %979 = vmatprep.subr.bf16.mxu0 0
        %980 = vmatpush1.bf16.msra.mxu0 0
        %981 = vmatprep.subr.bf16.mxu0 0
        %982 = vmatpush1.bf16.msra.mxu0 0
        %983 = vmatprep.subr.bf16.mxu0 0
        %984 = vmatpush1.bf16.msra.mxu0 0
        %985 = vmatprep.subr.bf16.mxu0 0
        %986 = vmatpush1.bf16.msra.mxu0 0
        %987 = vmatprep.subr.bf16.mxu0 0
        %988 = vmatpush1.bf16.msra.mxu0 0
        %989 = vmatprep.subr.bf16.mxu0 0
        %990 = vmatpush1.bf16.msra.mxu0 0
        %991 = vmatprep.subr.bf16.mxu0 0
        %992 = vmatpush1.bf16.msra.mxu0 0
        %993 = vmatprep.subr.bf16.mxu0 0
        %994 = vmatpush1.bf16.msra.mxu0 0
        %995 = vmatprep.subr.bf16.mxu0 0
        %996 = vmatpush1.bf16.msra.mxu0 0
        %997 = vmatprep.subr.bf16.mxu0 0
        %998 = vmatpush1.bf16.msra.mxu0 0
        %999 = vmatprep.subr.bf16.mxu0 0
        %1000 = vmatpush1.bf16.msra.mxu0 0
        %1001 = vmatprep.subr.bf16.mxu0 0
        %1002 = vmatpush1.bf16.msra.mxu0 0
        %1003 = vmatprep.subr.bf16.mxu0 0
        %1004 = vmatpush1.bf16.msra.mxu0 0
        %1005 = vmatprep.subr.bf16.mxu0 0
        %1006 = vmatpush1.bf16.msra.mxu0 0
        %1007 = vmatprep.mubr.bf16.mxu0 0
        %1008 = vmatmul.mubr.bf16.gmra.mrb[0].mxu0 %v969
        %v1009 = vpop.f32.mrb[0].mxu0
        %v1010 = vadd.f32 0.0, %v1009
        %v1011 = vpop.f32.mrb[0].mxu0
        %v1012 = vpop.f32.mrb[0].mxu0
        %v1013 = vpop.f32.mrb[0].mxu0
        %1014 = vdwg.mxu0
        %v1015 = vpack.c.bf16 %v1010, %v1010
        %vm1016 = vcmask 60416
        %1017 = vst.msk [vmem:[#allocation5] sm:$0xf] %vm1016, %v1015
        %v1019 = vunpack.c.l.b16 %v906
        %v1020 = vpack.c.b16 %v1019, %v1019
        %1021 = vrot.lane.b32.xlu0 %v1020, 120
        %v1022 = vpop.permute.xlu0 %1021
        %v1024 = vunpack.c.l.b16 %v907
        %v1025 = vpack.c.b16 %v1024, %v1024
        %1026 = vrot.lane.b32.xlu0 %v1025, 120
        %v1027 = vpop.permute.xlu0 %1026
        %v1029 = vsel %vm909, %v1022, 0
        %v1032 = vsel %vm909, %v1027, 0
        %1034 = vmatprep.subr.bf16.mxu0 0
        %1035 = vmatpush1.bf16.xpose.msra.mxu0 %v1032
        %1036 = vmatprep.subr.bf16.mxu0 0
        %1037 = vmatpush1.bf16.xpose.msra.mxu0 0
        %1038 = vmatprep.subr.bf16.mxu0 0
        %1039 = vmatpush1.bf16.xpose.msra.mxu0 0
        %1040 = vmatprep.subr.bf16.mxu0 0
        %1041 = vmatpush1.bf16.xpose.msra.mxu0 0
        %1042 = vmatprep.subr.bf16.mxu0 0
        %1043 = vmatpush1.bf16.xpose.msra.mxu0 0
        %1044 = vmatprep.subr.bf16.mxu0 0
        %1045 = vmatpush1.bf16.xpose.msra.mxu0 0
        %1046 = vmatprep.subr.bf16.mxu0 0
        %1047 = vmatpush1.bf16.xpose.msra.mxu0 0
        %1048 = vmatprep.subr.bf16.mxu0 0
        %1049 = vmatpush1.bf16.xpose.msra.mxu0 0
        %1050 = vmatprep.subr.bf16.mxu0 0
        %1051 = vmatpush1.bf16.xpose.msra.mxu0 0
        %1052 = vmatprep.subr.bf16.mxu0 0
        %1053 = vmatpush1.bf16.xpose.msra.mxu0 0
        %1054 = vmatprep.subr.bf16.mxu0 0
        %1055 = vmatpush1.bf16.xpose.msra.mxu0 0
        %1056 = vmatprep.subr.bf16.mxu0 0
        %1057 = vmatpush1.bf16.xpose.msra.mxu0 0
        %1058 = vmatprep.subr.bf16.mxu0 0
        %1059 = vmatpush1.bf16.xpose.msra.mxu0 0
        %1060 = vmatprep.subr.bf16.mxu0 0
        %1061 = vmatpush1.bf16.xpose.msra.mxu0 0
        %1062 = vmatprep.subr.bf16.mxu0 0
        %1063 = vmatpush1.bf16.xpose.msra.mxu0 0
        %1064 = vmatprep.subr.bf16.mxu0 0
        %1065 = vmatpush1.bf16.xpose.msra.mxu0 0
        %1066 = vmatprep.mubr.bf16.mxu0 0
        %1067 = vmatmul.mubr.bf16.gmra.mrb[0].mxu0 %v1029
        %v1068 = vpop.f32.mrb[0].mxu0
        %v1069 = vadd.f32 0.0, %v1068
        %v1070 = vpop.f32.mrb[0].mxu0
        %v1071 = vpop.f32.mrb[0].mxu0
        %v1072 = vpop.f32.mrb[0].mxu0
        %1073 = vdwg.mxu0
        %v1074 = vsel %vm909, %v1069, -inf
        %1075 = vmax.xlane.f32.xlu0 %v1074
        %v1076 = vpop.xlane.xlu0 %1075
        %v1077 = vsub.f32 %v1069, %v1076
        %v1078 = vmul.f32 %v1077, 1.442695
        %v1079 = vpow.pop %v1078
        %v1080 = vsel %vm909, %v1079, 0.0
        %1081 = vadd.xlane.f32.xlu0 %v1080
        %v1082 = vpop.xlane.xlu0 %1081
        %v1083 = vrcp.pop %v1082
        %v1084 = vmul.f32 %v1079, %v1083
        %v1085 = vpack.c.bf16 %v1084, %v1084
        %v1087 = vunpack.c.l.b16 %v908
        %v1088 = vpack.c.b16 %v1087, %v1087
        %1089 = vrot.lane.b32.xlu0 %v1088, 120
        %v1090 = vpop.permute.xlu0 %1089
        %v1092 = vsel %vm909, %v1085, 0
        %v1095 = vsel %vm971, %v1090, 0
        %1097 = vmatprep.subr.bf16.mxu0 0
        %1098 = vmatpush1.bf16.msra.mxu0 %v1095
        %1099 = vmatprep.subr.bf16.mxu0 0
        %1100 = vmatpush1.bf16.msra.mxu0 0
        %1101 = vmatprep.subr.bf16.mxu0 0
        %1102 = vmatpush1.bf16.msra.mxu0 0
        %1103 = vmatprep.subr.bf16.mxu0 0
        %1104 = vmatpush1.bf16.msra.mxu0 0
        %1105 = vmatprep.subr.bf16.mxu0 0
        %1106 = vmatpush1.bf16.msra.mxu0 0
        %1107 = vmatprep.subr.bf16.mxu0 0
        %1108 = vmatpush1.bf16.msra.mxu0 0
        %1109 = vmatprep.subr.bf16.mxu0 0
        %1110 = vmatpush1.bf16.msra.mxu0 0
        %1111 = vmatprep.subr.bf16.mxu0 0
        %1112 = vmatpush1.bf16.msra.mxu0 0
        %1113 = vmatprep.subr.bf16.mxu0 0
        %1114 = vmatpush1.bf16.msra.mxu0 0
        %1115 = vmatprep.subr.bf16.mxu0 0
        %1116 = vmatpush1.bf16.msra.mxu0 0
        %1117 = vmatprep.subr.bf16.mxu0 0
        %1118 = vmatpush1.bf16.msra.mxu0 0
        %1119 = vmatprep.subr.bf16.mxu0 0
        %1120 = vmatpush1.bf16.msra.mxu0 0
        %1121 = vmatprep.subr.bf16.mxu0 0
        %1122 = vmatpush1.bf16.msra.mxu0 0
        %1123 = vmatprep.subr.bf16.mxu0 0
        %1124 = vmatpush1.bf16.msra.mxu0 0
        %1125 = vmatprep.subr.bf16.mxu0 0
        %1126 = vmatpush1.bf16.msra.mxu0 0
        %1127 = vmatprep.subr.bf16.mxu0 0
        %1128 = vmatpush1.bf16.msra.mxu0 0
        %1129 = vmatprep.mubr.bf16.mxu0 0
        %1130 = vmatmul.mubr.bf16.gmra.mrb[0].mxu0 %v1092
        %v1131 = vpop.f32.mrb[0].mxu0
        %v1132 = vadd.f32 0.0, %v1131
        %v1133 = vpop.f32.mrb[0].mxu0
        %v1134 = vpop.f32.mrb[0].mxu0
        %v1135 = vpop.f32.mrb[0].mxu0
        %1136 = vdwg.mxu0
        %v1137 = vpack.c.bf16 %v1132, %v1132
        %v1139 = vunpack.c.l.b16 %v1137
        %v1140 = vpack.c.b16 %v1139, %v1139
        %1141 = vrot.lane.b32.xlu0 %v1140, 8
        %v1142 = vpop.permute.xlu0 %1141
        %vm1144 = vcmask 126016
        %1145 = vst.msk [vmem:[#allocation5] sm:$0xf] %vm1144, %v1142
        %1146 = vrot.lane.b32.xlu0 %v1020, 112
        %v1147 = vpop.permute.xlu0 %1146
        %1148 = vrot.lane.b32.xlu0 %v1025, 112
        %v1149 = vpop.permute.xlu0 %1148
        %v1151 = vsel %vm909, %v1147, 0
        %v1154 = vsel %vm909, %v1149, 0
        %1156 = vmatprep.subr.bf16.mxu0 0
        %1157 = vmatpush1.bf16.xpose.msra.mxu0 %v1154
        %1158 = vmatprep.subr.bf16.mxu0 0
        %1159 = vmatpush1.bf16.xpose.msra.mxu0 0
        %1160 = vmatprep.subr.bf16.mxu0 0
        %1161 = vmatpush1.bf16.xpose.msra.mxu0 0
        %1162 = vmatprep.subr.bf16.mxu0 0
        %1163 = vmatpush1.bf16.xpose.msra.mxu0 0
        %1164 = vmatprep.subr.bf16.mxu0 0
        %1165 = vmatpush1.bf16.xpose.msra.mxu0 0
        %1166 = vmatprep.subr.bf16.mxu0 0
        %1167 = vmatpush1.bf16.xpose.msra.mxu0 0
        %1168 = vmatprep.subr.bf16.mxu0 0
        %1169 = vmatpush1.bf16.xpose.msra.mxu0 0
        %1170 = vmatprep.subr.bf16.mxu0 0
        %1171 = vmatpush1.bf16.xpose.msra.mxu0 0
        %1172 = vmatprep.subr.bf16.mxu0 0
        %1173 = vmatpush1.bf16.xpose.msra.mxu0 0
        %1174 = vmatprep.subr.bf16.mxu0 0
        %1175 = vmatpush1.bf16.xpose.msra.mxu0 0
        %1176 = vmatprep.subr.bf16.mxu0 0
        %1177 = vmatpush1.bf16.xpose.msra.mxu0 0
        %1178 = vmatprep.subr.bf16.mxu0 0
        %1179 = vmatpush1.bf16.xpose.msra.mxu0 0
        %1180 = vmatprep.subr.bf16.mxu0 0
        %1181 = vmatpush1.bf16.xpose.msra.mxu0 0
        %1182 = vmatprep.subr.bf16.mxu0 0
        %1183 = vmatpush1.bf16.xpose.msra.mxu0 0
        %1184 = vmatprep.subr.bf16.mxu0 0
        %1185 = vmatpush1.bf16.xpose.msra.mxu0 0
        %1186 = vmatprep.subr.bf16.mxu0 0
        %1187 = vmatpush1.bf16.xpose.msra.mxu0 0
        %1188 = vmatprep.mubr.bf16.mxu0 0
        %1189 = vmatmul.mubr.bf16.gmra.mrb[0].mxu0 %v1151
        %v1190 = vpop.f32.mrb[0].mxu0
        %v1191 = vadd.f32 0.0, %v1190
        %v1192 = vpop.f32.mrb[0].mxu0
        %v1193 = vpop.f32.mrb[0].mxu0
        %v1194 = vpop.f32.mrb[0].mxu0
        %1195 = vdwg.mxu0
        %v1196 = vsel %vm909, %v1191, -inf
        %1197 = vmax.xlane.f32.xlu0 %v1196
        %v1198 = vpop.xlane.xlu0 %1197
        %v1199 = vsub.f32 %v1191, %v1198
        %v1200 = vmul.f32 %v1199, 1.442695
        %v1201 = vpow.pop %v1200
        %v1202 = vsel %vm909, %v1201, 0.0
        %1203 = vadd.xlane.f32.xlu0 %v1202
        %v1204 = vpop.xlane.xlu0 %1203
        %v1205 = vrcp.pop %v1204
        %v1206 = vmul.f32 %v1201, %v1205
        %v1207 = vpack.c.bf16 %v1206, %v1206
        %1208 = vrot.lane.b32.xlu0 %v1088, 112
        %v1209 = vpop.permute.xlu0 %1208
        %v1211 = vsel %vm909, %v1207, 0
        %v1214 = vsel %vm971, %v1209, 0
        %1216 = vmatprep.subr.bf16.mxu0 0
        %1217 = vmatpush1.bf16.msra.mxu0 %v1214
        %1218 = vmatprep.subr.bf16.mxu0 0
        %1219 = vmatpush1.bf16.msra.mxu0 0
        %1220 = vmatprep.subr.bf16.mxu0 0
        %1221 = vmatpush1.bf16.msra.mxu0 0
        %1222 = vmatprep.subr.bf16.mxu0 0
        %1223 = vmatpush1.bf16.msra.mxu0 0
        %1224 = vmatprep.subr.bf16.mxu0 0
        %1225 = vmatpush1.bf16.msra.mxu0 0
        %1226 = vmatprep.subr.bf16.mxu0 0
        %1227 = vmatpush1.bf16.msra.mxu0 0
        %1228 = vmatprep.subr.bf16.mxu0 0
        %1229 = vmatpush1.bf16.msra.mxu0 0
        %1230 = vmatprep.subr.bf16.mxu0 0
        %1231 = vmatpush1.bf16.msra.mxu0 0
        %1232 = vmatprep.subr.bf16.mxu0 0
        %1233 = vmatpush1.bf16.msra.mxu0 0
        %1234 = vmatprep.subr.bf16.mxu0 0
        %1235 = vmatpush1.bf16.msra.mxu0 0
        %1236 = vmatprep.subr.bf16.mxu0 0
        %1237 = vmatpush1.bf16.msra.mxu0 0
        %1238 = vmatprep.subr.bf16.mxu0 0
        %1239 = vmatpush1.bf16.msra.mxu0 0
        %1240 = vmatprep.subr.bf16.mxu0 0
        %1241 = vmatpush1.bf16.msra.mxu0 0
        %1242 = vmatprep.subr.bf16.mxu0 0
        %1243 = vmatpush1.bf16.msra.mxu0 0
        %1244 = vmatprep.subr.bf16.mxu0 0
        %1245 = vmatpush1.bf16.msra.mxu0 0
        %1246 = vmatprep.subr.bf16.mxu0 0
        %1247 = vmatpush1.bf16.msra.mxu0 0
        %1248 = vmatprep.mubr.bf16.mxu0 0
        %1249 = vmatmul.mubr.bf16.gmra.mrb[0].mxu0 %v1211
        %v1250 = vpop.f32.mrb[0].mxu0
        %v1251 = vadd.f32 0.0, %v1250
        %v1252 = vpop.f32.mrb[0].mxu0
        %v1253 = vpop.f32.mrb[0].mxu0
        %v1254 = vpop.f32.mrb[0].mxu0
        %1255 = vdwg.mxu0
        %v1256 = vpack.c.bf16 %v1251, %v1251
        %v1258 = vunpack.c.l.b16 %v1256
        %v1259 = vpack.c.b16 %v1258, %v1258
        %1260 = vrot.lane.b32.xlu0 %v1259, 16
        %v1261 = vpop.permute.xlu0 %1260
        %vm1263 = vcmask 191616
        %1264 = vst.msk [vmem:[#allocation5] sm:$0xf] %vm1263, %v1261
        %1265 = vrot.lane.b32.xlu0 %v1020, 104
        %v1266 = vpop.permute.xlu0 %1265
        %1267 = vrot.lane.b32.xlu0 %v1025, 104
        %v1268 = vpop.permute.xlu0 %1267
        %v1270 = vsel %vm909, %v1266, 0
        %v1273 = vsel %vm909, %v1268, 0
        %1275 = vmatprep.subr.bf16.mxu0 0
        %1276 = vmatpush1.bf16.xpose.msra.mxu0 %v1273
        %1277 = vmatprep.subr.bf16.mxu0 0
        %1278 = vmatpush1.bf16.xpose.msra.mxu0 0
        %1279 = vmatprep.subr.bf16.mxu0 0
        %1280 = vmatpush1.bf16.xpose.msra.mxu0 0
        %1281 = vmatprep.subr.bf16.mxu0 0
        %1282 = vmatpush1.bf16.xpose.msra.mxu0 0
        %1283 = vmatprep.subr.bf16.mxu0 0
        %1284 = vmatpush1.bf16.xpose.msra.mxu0 0
        %1285 = vmatprep.subr.bf16.mxu0 0
        %1286 = vmatpush1.bf16.xpose.msra.mxu0 0
        %1287 = vmatprep.subr.bf16.mxu0 0
        %1288 = vmatpush1.bf16.xpose.msra.mxu0 0
        %1289 = vmatprep.subr.bf16.mxu0 0
        %1290 = vmatpush1.bf16.xpose.msra.mxu0 0
        %1291 = vmatprep.subr.bf16.mxu0 0
        %1292 = vmatpush1.bf16.xpose.msra.mxu0 0
        %1293 = vmatprep.subr.bf16.mxu0 0
        %1294 = vmatpush1.bf16.xpose.msra.mxu0 0
        %1295 = vmatprep.subr.bf16.mxu0 0
        %1296 = vmatpush1.bf16.xpose.msra.mxu0 0
        %1297 = vmatprep.subr.bf16.mxu0 0
        %1298 = vmatpush1.bf16.xpose.msra.mxu0 0
        %1299 = vmatprep.subr.bf16.mxu0 0
        %1300 = vmatpush1.bf16.xpose.msra.mxu0 0
        %1301 = vmatprep.subr.bf16.mxu0 0
        %1302 = vmatpush1.bf16.xpose.msra.mxu0 0
        %1303 = vmatprep.subr.bf16.mxu0 0
        %1304 = vmatpush1.bf16.xpose.msra.mxu0 0
        %1305 = vmatprep.subr.bf16.mxu0 0
        %1306 = vmatpush1.bf16.xpose.msra.mxu0 0
        %1307 = vmatprep.mubr.bf16.mxu0 0
        %1308 = vmatmul.mubr.bf16.gmra.mrb[0].mxu0 %v1270
        %v1309 = vpop.f32.mrb[0].mxu0
        %v1310 = vadd.f32 0.0, %v1309
        %v1311 = vpop.f32.mrb[0].mxu0
        %v1312 = vpop.f32.mrb[0].mxu0
        %v1313 = vpop.f32.mrb[0].mxu0
        %1314 = vdwg.mxu0
        %v1315 = vsel %vm909, %v1310, -inf
        %1316 = vmax.xlane.f32.xlu0 %v1315
        %v1317 = vpop.xlane.xlu0 %1316
        %v1318 = vsub.f32 %v1310, %v1317
        %v1319 = vmul.f32 %v1318, 1.442695
        %v1320 = vpow.pop %v1319
        %v1321 = vsel %vm909, %v1320, 0.0
        %1322 = vadd.xlane.f32.xlu0 %v1321
        %v1323 = vpop.xlane.xlu0 %1322
        %v1324 = vrcp.pop %v1323
        %v1325 = vmul.f32 %v1320, %v1324
        %v1326 = vpack.c.bf16 %v1325, %v1325
        %1327 = vrot.lane.b32.xlu0 %v1088, 104
        %v1328 = vpop.permute.xlu0 %1327
        %v1330 = vsel %vm909, %v1326, 0
        %v1333 = vsel %vm971, %v1328, 0
        %1335 = vmatprep.subr.bf16.mxu0 0
        %1336 = vmatpush1.bf16.msra.mxu0 %v1333
        %1337 = vmatprep.subr.bf16.mxu0 0
        %1338 = vmatpush1.bf16.msra.mxu0 0
        %1339 = vmatprep.subr.bf16.mxu0 0
        %1340 = vmatpush1.bf16.msra.mxu0 0
        %1341 = vmatprep.subr.bf16.mxu0 0
        %1342 = vmatpush1.bf16.msra.mxu0 0
        %1343 = vmatprep.subr.bf16.mxu0 0
        %1344 = vmatpush1.bf16.msra.mxu0 0
        %1345 = vmatprep.subr.bf16.mxu0 0
        %1346 = vmatpush1.bf16.msra.mxu0 0
        %1347 = vmatprep.subr.bf16.mxu0 0
        %1348 = vmatpush1.bf16.msra.mxu0 0
        %1349 = vmatprep.subr.bf16.mxu0 0
        %1350 = vmatpush1.bf16.msra.mxu0 0
        %1351 = vmatprep.subr.bf16.mxu0 0
        %1352 = vmatpush1.bf16.msra.mxu0 0
        %1353 = vmatprep.subr.bf16.mxu0 0
        %1354 = vmatpush1.bf16.msra.mxu0 0
        %1355 = vmatprep.subr.bf16.mxu0 0
        %1356 = vmatpush1.bf16.msra.mxu0 0
        %1357 = vmatprep.subr.bf16.mxu0 0
        %1358 = vmatpush1.bf16.msra.mxu0 0
        %1359 = vmatprep.subr.bf16.mxu0 0
        %1360 = vmatpush1.bf16.msra.mxu0 0
        %1361 = vmatprep.subr.bf16.mxu0 0
        %1362 = vmatpush1.bf16.msra.mxu0 0
        %1363 = vmatprep.subr.bf16.mxu0 0
        %1364 = vmatpush1.bf16.msra.mxu0 0
        %1365 = vmatprep.subr.bf16.mxu0 0
        %1366 = vmatpush1.bf16.msra.mxu0 0
        %1367 = vmatprep.mubr.bf16.mxu0 0
        %1368 = vmatmul.mubr.bf16.gmra.mrb[0].mxu0 %v1330
        %v1369 = vpop.f32.mrb[0].mxu0
        %v1370 = vadd.f32 0.0, %v1369
        %v1371 = vpop.f32.mrb[0].mxu0
        %v1372 = vpop.f32.mrb[0].mxu0
        %v1373 = vpop.f32.mrb[0].mxu0
        %1374 = vdwg.mxu0
        %v1375 = vpack.c.bf16 %v1370, %v1370
        %v1377 = vunpack.c.l.b16 %v1375
        %v1378 = vpack.c.b16 %v1377, %v1377
        %1379 = vrot.lane.b32.xlu0 %v1378, 24
        %v1380 = vpop.permute.xlu0 %1379
        %vm1382 = vcmask 257216
        %1383 = vst.msk [vmem:[#allocation5] sm:$0xf] %vm1382, %v1380
        %v1384 = vld [vmem:[#allocation5] sm:$0xf]
        %v1385 = vld [vmem:[%s9] sm:$0xf]
        %v1386 = vld [vmem:[%s9 + $0x4] sm:$0xf]
        %v1387 = vld [vmem:[%s9 + $0x8] sm:$0xf]
        %v1388 = vld [vmem:[%s9 + $0xc] sm:$0xf]
        %v1389 = vld [vmem:[#allocation15] sm:$0x1]
        %v1391 = vlaneseq
        %v1392 = vshrl.u32 %v1391, 7
        %v1393 = vsub.s32 0, %v1392
        %v1394 = vrot.slane %v1389, %v1393
        %v1400 = vunpack.c.l.b16 %v1385
        %v1401 = vunpack.c.l.b16 %v1386
        %v1402 = vunpack.c.l.b16 %v1387
        %v1403 = vunpack.c.l.b16 %v1388
        %v1404 = vpack.c.b16 %v1401, %v1400
        %v1405 = vpack.c.b16 %v1403, %v1402
        %vm1408 = vcmask 261120
        %v1410 = vsel %vm1408, %v1384, 0
        %1412 = vmatprep.subr.bf16.mxu0 0
        %1413 = vmatpush1.bf16.msra.mxu0 %v1404
        %1414 = vmatprep.subr.bf16.mxu0 0
        %1415 = vmatpush1.bf16.msra.mxu0 %v1405
        %1416 = vmatprep.subr.bf16.mxu0 0
        %1417 = vmatpush1.bf16.msra.mxu0 0
        %1418 = vmatprep.subr.bf16.mxu0 0
        %1419 = vmatpush1.bf16.msra.mxu0 0
        %1420 = vmatprep.subr.bf16.mxu0 0
        %1421 = vmatpush1.bf16.msra.mxu0 0
        %1422 = vmatprep.subr.bf16.mxu0 0
        %1423 = vmatpush1.bf16.msra.mxu0 0
        %1424 = vmatprep.subr.bf16.mxu0 0
        %1425 = vmatpush1.bf16.msra.mxu0 0
        %1426 = vmatprep.subr.bf16.mxu0 0
        %1427 = vmatpush1.bf16.msra.mxu0 0
        %1428 = vmatprep.subr.bf16.mxu0 0
        %1429 = vmatpush1.bf16.msra.mxu0 0
        %1430 = vmatprep.subr.bf16.mxu0 0
        %1431 = vmatpush1.bf16.msra.mxu0 0
        %1432 = vmatprep.subr.bf16.mxu0 0
        %1433 = vmatpush1.bf16.msra.mxu0 0
        %1434 = vmatprep.subr.bf16.mxu0 0
        %1435 = vmatpush1.bf16.msra.mxu0 0
        %1436 = vmatprep.subr.bf16.mxu0 0
        %1437 = vmatpush1.bf16.msra.mxu0 0
        %1438 = vmatprep.subr.bf16.mxu0 0
        %1439 = vmatpush1.bf16.msra.mxu0 0
        %1440 = vmatprep.subr.bf16.mxu0 0
        %1441 = vmatpush1.bf16.msra.mxu0 0
        %1442 = vmatprep.subr.bf16.mxu0 0
        %1443 = vmatpush1.bf16.msra.mxu0 0
        %1444 = vmatprep.mubr.bf16.mxu0 0
        %1445 = vmatmul.mubr.bf16.gmra.mrb[0].mxu0 %v1410
        %v1446 = vpop.f32.mrb[0].mxu0
        %v1447 = vadd.f32 %v1394, %v1446
        %v1448 = vpop.f32.mrb[0].mxu0
        %v1449 = vpop.f32.mrb[0].mxu0
        %v1450 = vpop.f32.mrb[0].mxu0
        %1451 = vdwg.mxu0
        %v1452 = vadd.f32 %v901, %v1447
        %v1453 = vld [vmem:[#allocation17] sm:$0x1]
        %v1454 = vld [vmem:[#allocation18] sm:$0x1]
        %v1455 = vsel %vm1408, %v1452, 0.0
        %1456 = vadd.xlane.f32.xlu0 %v1455
        %v1457 = vpop.xlane.xlu0 %1456
        %v1458 = vrcp.pop 32.0
        %v1459 = vmul.f32 %v1457, %v1458
        %v1460 = vsub.f32 %v1452, %v1459
        %v1461 = vmul.f32 %v1460, %v1460
        %v1462 = vsel %vm1408, %v1461, 0.0
        %1463 = vadd.xlane.f32.xlu0 %v1462
        %v1464 = vpop.xlane.xlu0 %1463
        %v1465 = vmul.f32 %v1464, %v1458
        %v1466 = vadd.f32 %v1465, 1e-05
        %v1467 = vrsqrt.pop %v1466
        %v1468 = vmul.f32 %v1460, %v1467
        %v1470 = vlaneseq
        %v1471 = vshrl.u32 %v1470, 7
        %v1472 = vsub.s32 0, %v1471
        %v1473 = vrot.slane %v1453, %v1472
        %v1475 = vmul.f32 %v1468, %v1473
        %v1477 = vlaneseq
        %v1478 = vshrl.u32 %v1477, 7
        %v1479 = vsub.s32 0, %v1478
        %v1480 = vrot.slane %v1454, %v1479
        %v1482 = vadd.f32 %v1475, %v1480
        %v1483 = vpack.c.bf16 %v1482, %v1482
        %v1484 = vld [vmem:[%s13] sm:$0xf]
        %v1485 = vld [vmem:[%s13 + $0x4] sm:$0xf]
        %v1486 = vld [vmem:[%s13 + $0x8] sm:$0xf]
        %v1487 = vld [vmem:[%s13 + $0xc] sm:$0xf]
        %v1488 = vld [vmem:[%s14] sm:$0x1]
        %v1490 = vlaneseq
        %v1491 = vshrl.u32 %v1490, 7
        %v1492 = vsub.s32 0, %v1491
        %v1493 = vrot.slane %v1488, %v1492
        %v1499 = vunpack.c.l.b16 %v1484
        %v1500 = vunpack.c.l.b16 %v1485
        %v1501 = vunpack.c.l.b16 %v1486
        %v1502 = vunpack.c.l.b16 %v1487
        %v1503 = vpack.c.b16 %v1500, %v1499
        %v1504 = vpack.c.b16 %v1502, %v1501
        %v1508 = vsel %vm1408, %v1483, 0
        %1510 = vmatprep.subr.bf16.mxu0 0
        %1511 = vmatpush1.bf16.msra.mxu0 %v1503
        %1512 = vmatprep.subr.bf16.mxu0 0
        %1513 = vmatpush1.bf16.msra.mxu0 %v1504
        %1514 = vmatprep.subr.bf16.mxu0 0
        %1515 = vmatpush1.bf16.msra.mxu0 0
        %1516 = vmatprep.subr.bf16.mxu0 0
        %1517 = vmatpush1.bf16.msra.mxu0 0
        %1518 = vmatprep.subr.bf16.mxu0 0
        %1519 = vmatpush1.bf16.msra.mxu0 0
        %1520 = vmatprep.subr.bf16.mxu0 0
        %1521 = vmatpush1.bf16.msra.mxu0 0
        %1522 = vmatprep.subr.bf16.mxu0 0
        %1523 = vmatpush1.bf16.msra.mxu0 0
        %1524 = vmatprep.subr.bf16.mxu0 0
        %1525 = vmatpush1.bf16.msra.mxu0 0
        %1526 = vmatprep.subr.bf16.mxu0 0
        %1527 = vmatpush1.bf16.msra.mxu0 0
        %1528 = vmatprep.subr.bf16.mxu0 0
        %1529 = vmatpush1.bf16.msra.mxu0 0
        %1530 = vmatprep.subr.bf16.mxu0 0
        %1531 = vmatpush1.bf16.msra.mxu0 0
        %1532 = vmatprep.subr.bf16.mxu0 0
        %1533 = vmatpush1.bf16.msra.mxu0 0
        %1534 = vmatprep.subr.bf16.mxu0 0
        %1535 = vmatpush1.bf16.msra.mxu0 0
        %1536 = vmatprep.subr.bf16.mxu0 0
        %1537 = vmatpush1.bf16.msra.mxu0 0
        %1538 = vmatprep.subr.bf16.mxu0 0
        %1539 = vmatpush1.bf16.msra.mxu0 0
        %1540 = vmatprep.subr.bf16.mxu0 0
        %1541 = vmatpush1.bf16.msra.mxu0 0
        %1542 = vmatprep.mubr.bf16.mxu0 0
        %1543 = vmatmul.mubr.bf16.gmra.mrb[0].mxu0 %v1508
        %v1544 = vpop.f32.mrb[0].mxu0
        %v1545 = vadd.f32 %v1493, %v1544
        %v1546 = vpop.f32.mrb[0].mxu0
        %v1547 = vpop.f32.mrb[0].mxu0
        %v1548 = vpop.f32.mrb[0].mxu0
        %1549 = vdwg.mxu0
        %v1550 = vmax.f32 %v1545, 0.0
        %v1551 = vpack.c.bf16 %v1550, %v1550
        %v1552 = vld [vmem:[%s15] sm:$0xf]
        %v1553 = vld [vmem:[%s15 + $0x4] sm:$0xf]
        %v1554 = vld [vmem:[%s15 + $0x8] sm:$0xf]
        %v1555 = vld [vmem:[%s15 + $0xc] sm:$0xf]
        %v1556 = vld [vmem:[%s15 + $0x10] sm:$0xf]
        %v1557 = vld [vmem:[%s15 + $0x14] sm:$0xf]
        %v1558 = vld [vmem:[%s15 + $0x18] sm:$0xf]
        %v1559 = vld [vmem:[%s15 + $0x1c] sm:$0xf]
        %v1560 = vld [vmem:[%s16] sm:$0x1]
        %v1562 = vlaneseq
        %v1563 = vshrl.u32 %v1562, 7
        %v1564 = vsub.s32 0, %v1563
        %v1565 = vrot.slane %v1560, %v1564
        %v1575 = vunpack.c.l.b16 %v1552
        %v1576 = vunpack.c.l.b16 %v1553
        %v1577 = vunpack.c.l.b16 %v1554
        %v1578 = vunpack.c.l.b16 %v1555
        %v1579 = vunpack.c.l.b16 %v1556
        %v1580 = vunpack.c.l.b16 %v1557
        %v1581 = vunpack.c.l.b16 %v1558
        %v1582 = vunpack.c.l.b16 %v1559
        %v1583 = vpack.c.b16 %v1576, %v1575
        %v1584 = vpack.c.b16 %v1578, %v1577
        %v1585 = vpack.c.b16 %v1580, %v1579
        %v1586 = vpack.c.b16 %v1582, %v1581
        %vm1591 = vcmask 523264
        %v1593 = vsel %vm1591, %v1551, 0
        %1595 = vmatprep.subr.bf16.mxu0 0
        %1596 = vmatpush1.bf16.msra.mxu0 %v1583
        %1597 = vmatprep.subr.bf16.mxu0 0
        %1598 = vmatpush1.bf16.msra.mxu0 %v1584
        %1599 = vmatprep.subr.bf16.mxu0 0
        %1600 = vmatpush1.bf16.msra.mxu0 %v1585
        %1601 = vmatprep.subr.bf16.mxu0 0
        %1602 = vmatpush1.bf16.msra.mxu0 %v1586
        %1603 = vmatprep.subr.bf16.mxu0 0
        %1604 = vmatpush1.bf16.msra.mxu0 0
        %1605 = vmatprep.subr.bf16.mxu0 0
        %1606 = vmatpush1.bf16.msra.mxu0 0
        %1607 = vmatprep.subr.bf16.mxu0 0
        %1608 = vmatpush1.bf16.msra.mxu0 0
        %1609 = vmatprep.subr.bf16.mxu0 0
        %1610 = vmatpush1.bf16.msra.mxu0 0
        %1611 = vmatprep.subr.bf16.mxu0 0
        %1612 = vmatpush1.bf16.msra.mxu0 0
        %1613 = vmatprep.subr.bf16.mxu0 0
        %1614 = vmatpush1.bf16.msra.mxu0 0
        %1615 = vmatprep.subr.bf16.mxu0 0
        %1616 = vmatpush1.bf16.msra.mxu0 0
        %1617 = vmatprep.subr.bf16.mxu0 0
        %1618 = vmatpush1.bf16.msra.mxu0 0
        %1619 = vmatprep.subr.bf16.mxu0 0
        %1620 = vmatpush1.bf16.msra.mxu0 0
        %1621 = vmatprep.subr.bf16.mxu0 0
        %1622 = vmatpush1.bf16.msra.mxu0 0
        %1623 = vmatprep.subr.bf16.mxu0 0
        %1624 = vmatpush1.bf16.msra.mxu0 0
        %1625 = vmatprep.subr.bf16.mxu0 0
        %1626 = vmatpush1.bf16.msra.mxu0 0
        %1627 = vmatprep.mubr.bf16.mxu0 0
        %1628 = vmatmul.mubr.bf16.gmra.mrb[0].mxu0 %v1593
        %v1629 = vpop.f32.mrb[0].mxu0
        %v1630 = vadd.f32 %v1565, %v1629
        %v1631 = vpop.f32.mrb[0].mxu0
        %v1632 = vpop.f32.mrb[0].mxu0
        %v1633 = vpop.f32.mrb[0].mxu0
        %1634 = vdwg.mxu0
        %v1635 = vadd.f32 %v1452, %v1630
        %1636 = vst.msk [vmem:[%s656] sm:$0xff] %vm1408, %v1635
        %s1637 = sand.u32 %s420, 1
        %s1638 = scalar_lea.sflag [#allocation8], %s1637
        %s1639 = sand.u32 %s420, 1
        %s1640 = smul.addr %s1639, 8
        %s1641 = scalar_lea.vmem [#allocation20], %s1640
        // Predicated region
        $region125: #{tpu_custom_call.1} parent=87 // pred_check
          %p1642 = pneg %p430
        $region126: #{tpu_custom_call.1} parent=87 // pred_check_branch
          %1644 = sbr.rel (%p1642) target = $region128
        $region127: #{tpu_custom_call.1} parent=87 // pred_region
          %s1646 = ssub.s32 128, 128
          %1647 = vsyncadd %s1638, %s1646
          %s1648 = sadd.s32 %s41, %s40
          %s1649 = smul.addr %s1648, 128
          %s1650 = scalar_lea.hbm %s17, %s1649
          %s1652 = sshll.u32 %s1641, 4
          %s1653 = int_to_ptr.vmem [resolvable:$true] %s1652
          %1655 = dma.vmem_to_hbm [thread:$0]  %s1653, 128, %s1650, %s1638
        $region128: #{tpu_custom_call.1} parent=87 // pred_fallthru
          _
      $region88: #{tpu_custom_call.1} parent=5 // pred_fallthru
        _
      %p1656 = scmp.le.s32.totalorder 2, %s31
      // Predicated region
      $region129: #{tpu_custom_call.1} parent=5 // pred_check
        %p1657 = pneg %p1656
      $region130: #{tpu_custom_call.1} parent=5 // pred_check_branch
        %1659 = sbr.rel (%p1657) target = $region132
      $region131: #{tpu_custom_call.1} parent=5 // pred_region
        %s1660 = ssub.s32 %s31, 2
        // Predicated region
        $region133: #{tpu_custom_call.1} parent=131 // pred_check
          %p1661 = pneg %p436
        $region134: #{tpu_custom_call.1} parent=131 // pred_check_branch
          %1663 = sbr.rel (%p1661) target = $region136
        $region135: #{tpu_custom_call.1} parent=131 // pred_region
          %s1664 = sand.u32 %s421, 1
          %s1665 = scalar_lea.sflag [#allocation8], %s1664
          %s1666 = sand.u32 %s421, 1
          %s1667 = smul.addr %s1666, 8
          %s1668 = scalar_lea.vmem [#allocation20], %s1667
          %1669 = dma.done %s1665, 128
        $region136: #{tpu_custom_call.1} parent=131 // pred_fallthru
          _
      $region132: #{tpu_custom_call.1} parent=5 // pred_fallthru
        _
    $region6: #{tpu_custom_call.1} parent=1 // loop_footer
      %s35 = sadd.s32 1, %s31
    $region7: #{tpu_custom_call.1} parent=1 // loop_footer_branch
      %30 = sbr.rel target = $region3
    $region8: #{tpu_custom_call.1} parent=1 // loop_exit
      _
    %1670 = vsyncpa [#allocation7], 1
    %s1671 = scalar_lea.sflag [#allocation7], 1
    %1672 = vsyncpa %s1671, 1
    %1673 = vsyncpa [#allocation10], 1
    %1674 = vsyncpa [#allocation13], 1
    %1675 = vsyncpa [#allocation16], 1
    %1676 = vsyncpa [#allocation19], 1
    %1677 = vsyncpa [#allocation8], 1
    %s1678 = scalar_lea.sflag [#allocation8], 1
    %1679 = vsyncpa %s1678, 1

</llo_original>
